<compile_context>
chip_gen: v6e
topology: v6e:2x2x1
jax: 0.10.0
libtpu: 0.0.40
codegen_flags: <defaults>
</compile_context>

<pallas_src>
import functools
import math

import jax
import jax.numpy as jnp
from jax.experimental import pallas as pl
from jax.experimental.pallas import tpu as pltpu


_STEP_VMEM_BUDGET = 16 * 1024 * 1024     # per-grid-step working-set target (safe on v7x 64 MiB)
_VMEM_LIMIT_BYTES = 40 * 1024 * 1024     # above 16/32 MiB scoped defaults, below every gen's physical
_MAX_BLOCK_ROWS = 65536                  # hard cap on rows (of the array fed to pallas_call) per step
_PACKED_WEIGHT_BUDGET = 8 * 1024 * 1024  # max bytes for block-diag expanded resident weights


def _round_up(v, a):
    return -(-v // a) * a


def _make_mlp_kernel(nlayers, compute_dtype):
    def kernel(*refs):
        x_ref = refs[0]
        o_ref = refs[-1]
        wb = refs[1:-1]  # w1, b1, w2, b2, ..., wn, bn
        h = x_ref[...].astype(compute_dtype)          # bf16 (or f32) MXU operands
        for l in range(nlayers):
            w = wb[2 * l][...]
            b = wb[2 * l + 1][...]                     # bias kept in f32 (no round-trip)
            h = jnp.dot(h, w, preferred_element_type=jnp.float32)
            h = h + b
            if l < nlayers - 1:
                h = jnp.maximum(h, 0.0).astype(compute_dtype)
        o_ref[...] = h.astype(o_ref.dtype)
    return kernel


def prepare_mlp_params(params, *, use_bf16=True):
    """One-time weight prep (hoisted out of the per-call jit): block-diagonal
    row-packing expansion + optional bf16 cast.  params: list of (w:(fan_in,fan_out),
    b:(1,fan_out)) pairs."""
    ninput = int(params[0][0].shape[0])
    noutput = int(params[-1][0].shape[1])
    compute_dtype = jnp.bfloat16 if use_bf16 else jnp.float32

    # Lane-dense packing factor: fold `pack` logical rows into one 128-lane output row.
    pack = 128 // noutput if (0 < noutput < 128 and 128 % noutput == 0) else 1
    if pack > 1:
        exp_bytes = (pack ** 2) * sum(int(w.size) for w, _ in params) \
            * jnp.dtype(compute_dtype).itemsize
        if exp_bytes > _PACKED_WEIGHT_BUDGET:
            pack = 1  # fall back to unpacked resident weights (see TODO above)

    flat = []
    for w, b in params:
        if pack > 1:
            w = jnp.kron(jnp.eye(pack, dtype=w.dtype), w)     # block-diagonal expansion
            b = jnp.tile(b.reshape(1, -1), (1, pack))
        flat.append(w.astype(compute_dtype))
        flat.append(b.reshape(1, -1).astype(jnp.float32))
    return dict(flat_wb=tuple(flat), pack=pack, ninput=ninput, noutput=noutput)


@functools.partial(jax.jit, static_argnames=("pack", "ninput", "noutput"))
def _mlp_forward_impl(x, flat_wb, *, pack, ninput, noutput):
    nlayers = len(flat_wb) // 2
    compute_dtype = flat_wb[0].dtype
    out_dtype = x.dtype
    lead = x.shape[:-1]

    xm = x.reshape(-1, ninput)
    m = xm.shape[0]

    # ---- lane-dense row packing (exact row-major fold; zero-pad rows only if needed) ----
    if pack > 1:
        m_pad = _round_up(m, pack)
        if m_pad != m:
            xm = jnp.pad(xm, ((0, m_pad - m), (0, 0)))
        xk = xm.reshape(m_pad // pack, pack * ninput)
    else:
        m_pad = m
        xk = xm
    R, cin = xk.shape                      # rows / lanes of the array actually tiled
    cout = pack * noutput                  # = 128 on the packed path

    # ---- row-tile selection: as large as a per-step VMEM budget allows, grid >= 2 ----
    isz = jnp.dtype(x.dtype).itemsize
    osz = jnp.dtype(out_dtype).itemsize
    csz = jnp.dtype(compute_dtype).itemsize
    per_row_vmem = (2 * cin * isz + 2 * cout * osz                       # double-buffered I/O
                    + sum(int(w.shape[1]) * (4 + csz) for w in flat_wb[0::2]))  # intermediates
    br = max(int(_STEP_VMEM_BUDGET // max(per_row_vmem, 1)), 16)
    br = min(br, _MAX_BLOCK_ROWS)
    br = max((br // 16) * 16, 16)          # multiple of 16: bf16 sublane packing + (8,128) rule
    if R > 16:                             # keep >= 2 grid steps so both v7x TCs get work
        br = min(br, _round_up(pl.cdiv(R, 2), 16))
    if br >= R:
        block_rows, grid_n = R, 1          # single block == full array dims (always legal)
    else:
        block_rows, grid_n = br, pl.cdiv(R, br)

    # ---- specs: streamed x/out tiles, resident (constant index_map) weights ----
    flat_args = [xk]
    in_specs = [pl.BlockSpec((block_rows, cin), lambda i: (i, 0))]
    for l in range(nlayers):
        w, b = flat_wb[2 * l], flat_wb[2 * l + 1]
        flat_args += [w, b]
        in_specs += [pl.BlockSpec(w.shape, lambda i: (0, 0)),
                     pl.BlockSpec(b.shape, lambda i: (0, 0))]
    out_spec = pl.BlockSpec((block_rows, cout), lambda i: (i, 0))

    flops = 2 * R * sum(int(w.shape[0]) * int(w.shape[1]) for w in flat_wb[0::2])
    bytes_accessed = (R * cin * isz + R * cout * osz
                      + sum(int(a.size) * jnp.dtype(a.dtype).itemsize for a in flat_wb))

    out = pl.pallas_call(
        _make_mlp_kernel(nlayers, compute_dtype),
        out_shape=jax.ShapeDtypeStruct((R, cout), out_dtype),
        grid_spec=pltpu.PrefetchScalarGridSpec(
            num_scalar_prefetch=0,
            grid=(grid_n,),
            in_specs=in_specs,
            out_specs=out_spec,
        ),
        compiler_params=pltpu.CompilerParams(
            dimension_semantics=("parallel",),
            vmem_limit_bytes=_VMEM_LIMIT_BYTES,
        ),
        cost_estimate=pl.CostEstimate(
            flops=flops, transcendentals=0, bytes_accessed=bytes_accessed),
    )(*flat_args)

    if pack > 1:
        out = out.reshape(m_pad, noutput)[:m]   # exact row-major unfold; drop pad rows
    return out.reshape(*lead, noutput)


def mlp_forward(x, prepared):
    return _mlp_forward_impl(x, prepared["flat_wb"], pack=prepared["pack"],
                             ninput=prepared["ninput"], noutput=prepared["noutput"])


def init_params(key, ninput, nh, noutput, nlayers):
    """nn.Linear-style init; weights stored transposed as (fan_in, fan_out)."""
    if nlayers == 1:
        dims = [(ninput, noutput)]
    else:
        dims = [(ninput, nh)] + [(nh, nh)] * (nlayers - 2) + [(nh, noutput)]
    params = []
    for fan_in, fan_out in dims:
        key, kw, kb = jax.random.split(key, 3)
        bound = 1.0 / math.sqrt(fan_in)
        w = jax.random.uniform(kw, (fan_in, fan_out), jnp.float32, -bound, bound)
        b = jax.random.uniform(kb, (1, fan_out), jnp.float32, -bound, bound)
        params.append((w, b))
    return params


def mlp_ref(x, params):
    """Pure-JAX f32 reference matching the PyTorch forward."""
    ninput = params[0][0].shape[0]
    lead = x.shape[:-1]
    h = x.reshape(-1, ninput)
    for i, (w, b) in enumerate(params):
        h = h @ w + b
        if i < len(params) - 1:
            h = jnp.maximum(h, 0.0)
    return h.reshape(*lead, -1)


if __name__ == "__main__":
    # MLP(ninput=16, nh=32, noutput=8, nlayers=3)
    ninput, nh, noutput, nlayers = 16, 32, 8, 3
    key = jax.random.PRNGKey(0)
    kx, kp = jax.random.split(key)

    x = jax.random.normal(kx, (2, 4, ninput), dtype=jnp.float32)  # M = 8 logical rows
    params = init_params(kp, ninput, nh, noutput, nlayers)

    prepared = prepare_mlp_params(params, use_bf16=True)
    out = jax.block_until_ready(mlp_forward(x, prepared))
    ref = mlp_ref(x, params)

    assert out.shape == (2, 4, noutput), out.shape
    # bf16 matmul operands (f32 accumulation) -> relaxed tolerance vs f32 reference.
    max_err = float(jnp.abs(out - ref).max())
    assert jnp.allclose(out, ref, atol=3e-2, rtol=3e-2), max_err

    print("KERNEL_OK")
</pallas_src>

<mosaic_0001>
module attributes {stable_mosaic.version = 11 : i64} {
  func.func @kernel(%arg0: i32, %arg1: memref<1x256xf32, #tpu.memory_space<vmem>>, %arg2: memref<256x512xbf16, #tpu.memory_space<vmem>>, %arg3: memref<1x512xf32, #tpu.memory_space<vmem>>, %arg4: memref<512x512xbf16, #tpu.memory_space<vmem>>, %arg5: memref<1x512xf32, #tpu.memory_space<vmem>>, %arg6: memref<512x128xbf16, #tpu.memory_space<vmem>>, %arg7: memref<1x128xf32, #tpu.memory_space<vmem>>, %arg8: memref<1x128xf32, #tpu.memory_space<vmem>>) attributes {dimension_semantics = [#tpu.dimension_semantics<parallel>], iteration_bounds = array<i64: 1>, scalar_prefetch = 0 : i64, scratch_operands = 0 : i64, tpu.core_type = #tpu.core_type<tc>, window_params = [{transform_indices = @transform_0, window_bounds = array<i64: 1, 256>}, {pipeline_mode = #tpu.pipeline_mode<synchronous>, transform_indices = @transform_1, window_bounds = array<i64: 256, 512>}, {pipeline_mode = #tpu.pipeline_mode<synchronous>, transform_indices = @transform_2, window_bounds = array<i64: 1, 512>}, {pipeline_mode = #tpu.pipeline_mode<synchronous>, transform_indices = @transform_3, window_bounds = array<i64: 512, 512>}, {pipeline_mode = #tpu.pipeline_mode<synchronous>, transform_indices = @transform_4, window_bounds = array<i64: 1, 512>}, {pipeline_mode = #tpu.pipeline_mode<synchronous>, transform_indices = @transform_5, window_bounds = array<i64: 512, 128>}, {pipeline_mode = #tpu.pipeline_mode<synchronous>, transform_indices = @transform_6, window_bounds = array<i64: 1, 128>}, {transform_indices = @transform_7, window_bounds = array<i64: 1, 128>}]} {
    %c0 = arith.constant 0 : index
    %c0_0 = arith.constant 0 : index
    %0 = vector.load %arg1[%c0, %c0_0] : memref<1x256xf32, #tpu.memory_space<vmem>>, vector<1x256xf32>
    %1 = arith.truncf %0 : vector<1x256xf32> to vector<1x256xbf16>
    %c0_1 = arith.constant 0 : index
    %c0_2 = arith.constant 0 : index
    %2 = vector.load %arg2[%c0_1, %c0_2] : memref<256x512xbf16, #tpu.memory_space<vmem>>, vector<256x512xbf16>
    %c0_3 = arith.constant 0 : index
    %c0_4 = arith.constant 0 : index
    %3 = vector.load %arg3[%c0_3, %c0_4] : memref<1x512xf32, #tpu.memory_space<vmem>>, vector<1x512xf32>
    %cst = arith.constant dense<0.000000e+00> : vector<1x512xf32>
    %4 = tpu.matmul %1, %2, %cst {dimension_numbers = #tpu.dot_dimension_numbers<[1], [0], [0], [1], [0, 0, 1, 1], [], []>} : vector<1x256xbf16>, vector<256x512xbf16>, vector<1x512xf32> -> vector<1x512xf32>
    %5 = arith.addf %4, %3 : vector<1x512xf32>
    %cst_5 = arith.constant 0.000000e+00 : f32
    %6 = vector.broadcast %cst_5 : f32 to vector<1x512xf32>
    %7 = arith.maximumf %5, %6 : vector<1x512xf32>
    %8 = arith.truncf %7 : vector<1x512xf32> to vector<1x512xbf16>
    %c0_6 = arith.constant 0 : index
    %c0_7 = arith.constant 0 : index
    %9 = vector.load %arg4[%c0_6, %c0_7] : memref<512x512xbf16, #tpu.memory_space<vmem>>, vector<512x512xbf16>
    %c0_8 = arith.constant 0 : index
    %c0_9 = arith.constant 0 : index
    %10 = vector.load %arg5[%c0_8, %c0_9] : memref<1x512xf32, #tpu.memory_space<vmem>>, vector<1x512xf32>
    %cst_10 = arith.constant dense<0.000000e+00> : vector<1x512xf32>
    %11 = tpu.matmul %8, %9, %cst_10 {dimension_numbers = #tpu.dot_dimension_numbers<[1], [0], [0], [1], [0, 0, 1, 1], [], []>} : vector<1x512xbf16>, vector<512x512xbf16>, vector<1x512xf32> -> vector<1x512xf32>
    %12 = arith.addf %11, %10 : vector<1x512xf32>
    %cst_11 = arith.constant 0.000000e+00 : f32
    %13 = vector.broadcast %cst_11 : f32 to vector<1x512xf32>
    %14 = arith.maximumf %12, %13 : vector<1x512xf32>
    %15 = arith.truncf %14 : vector<1x512xf32> to vector<1x512xbf16>
    %c0_12 = arith.constant 0 : index
    %c0_13 = arith.constant 0 : index
    %16 = vector.load %arg6[%c0_12, %c0_13] : memref<512x128xbf16, #tpu.memory_space<vmem>>, vector<512x128xbf16>
    %c0_14 = arith.constant 0 : index
    %c0_15 = arith.constant 0 : index
    %17 = vector.load %arg7[%c0_14, %c0_15] : memref<1x128xf32, #tpu.memory_space<vmem>>, vector<1x128xf32>
    %cst_16 = arith.constant dense<0.000000e+00> : vector<1x128xf32>
    %18 = tpu.matmul %15, %16, %cst_16 {dimension_numbers = #tpu.dot_dimension_numbers<[1], [0], [0], [1], [0, 0, 1, 1], [], []>} : vector<1x512xbf16>, vector<512x128xbf16>, vector<1x128xf32> -> vector<1x128xf32>
    %19 = arith.addf %18, %17 : vector<1x128xf32>
    %c0_17 = arith.constant 0 : index
    %c0_18 = arith.constant 0 : index
    %20 = vector.load %arg8[%c0_17, %c0_18] : memref<1x128xf32, #tpu.memory_space<vmem>>, vector<1x128xf32>
    tpu.vector_store %arg8[%c0_17, %c0_18], %19 {strides = array<i32>} : memref<1x128xf32, #tpu.memory_space<vmem>>, vector<1x128xf32>,
    return
  }
  func.func @transform_0(%arg0: i32) -> (i32, i32) {
    %c0_i32 = arith.constant 0 : i32
    %c0_i32_0 = arith.constant 0 : i32
    return %arg0, %c0_i32 : i32, i32
  }
  func.func @transform_1(%arg0: i32) -> (i32, i32) {
    %c0_i32 = arith.constant 0 : i32
    %c0_i32_0 = arith.constant 0 : i32
    %c0_i32_1 = arith.constant 0 : i32
    return %c0_i32, %c0_i32_0 : i32, i32
  }
  func.func @transform_2(%arg0: i32) -> (i32, i32) {
    %c0_i32 = arith.constant 0 : i32
    %c0_i32_0 = arith.constant 0 : i32
    %c0_i32_1 = arith.constant 0 : i32
    return %c0_i32, %c0_i32_0 : i32, i32
  }
  func.func @transform_3(%arg0: i32) -> (i32, i32) {
    %c0_i32 = arith.constant 0 : i32
    %c0_i32_0 = arith.constant 0 : i32
    %c0_i32_1 = arith.constant 0 : i32
    return %c0_i32, %c0_i32_0 : i32, i32
  }
  func.func @transform_4(%arg0: i32) -> (i32, i32) {
    %c0_i32 = arith.constant 0 : i32
    %c0_i32_0 = arith.constant 0 : i32
    %c0_i32_1 = arith.constant 0 : i32
    return %c0_i32, %c0_i32_0 : i32, i32
  }
  func.func @transform_5(%arg0: i32) -> (i32, i32) {
    %c0_i32 = arith.constant 0 : i32
    %c0_i32_0 = arith.constant 0 : i32
    %c0_i32_1 = arith.constant 0 : i32
    return %c0_i32, %c0_i32_0 : i32, i32
  }
  func.func @transform_6(%arg0: i32) -> (i32, i32) {
    %c0_i32 = arith.constant 0 : i32
    %c0_i32_0 = arith.constant 0 : i32
    %c0_i32_1 = arith.constant 0 : i32
    return %c0_i32, %c0_i32_0 : i32, i32
  }
  func.func @transform_7(%arg0: i32) -> (i32, i32) {
    %c0_i32 = arith.constant 0 : i32
    %c0_i32_0 = arith.constant 0 : i32
    return %arg0, %c0_i32 : i32, i32
  }
}

</mosaic_0001>

<llo_original>
// kernel: _mlp_forward_impl.1
$region0: #{_mlp_forward_impl.1}
  #allocation0 [shape = 'u32[]', space=smem, size = 0x4, offset = 0x4, fixed_abs, tag = 'smem constant byte address 0x4 - core index']
  #allocation1 [shape = 'u32[144,128]{1,0:T(1,128)}', space=vmem, size = 0x12000, scoped, tag = 'internal scratch']
  %s0 = inlined_call_operand.vmem [shape: f32[1,256], index: 0, kind: input, shape index: {}]
  %s1 = inlined_call_operand.hbm [shape: bf16[256,512], index: 1, kind: input, shape index: {}]
  %s2 = inlined_call_operand.vmem [shape: f32[1,512], index: 2, kind: input, shape index: {}]
  %s3 = inlined_call_operand.hbm [shape: bf16[512,512], index: 3, kind: input, shape index: {}]
  %s4 = inlined_call_operand.vmem [shape: f32[1,512], index: 4, kind: input, shape index: {}]
  %s5 = inlined_call_operand.hbm [shape: bf16[512,128], index: 5, kind: input, shape index: {}]
  %s6 = inlined_call_operand.vmem [shape: f32[1,128], index: 6, kind: input, shape index: {}]
  %s7 = inlined_call_operand.vmem [shape: f32[1,128], index: 7, kind: output, shape index: {}]
  %s8 = sld [smem:[#allocation0]]
  $region50: #{_mlp_forward_impl.1} parent=0
    _
  %s10 = ssub.s32 1, %s8
  %s11 = scalar_select 0, %s10, %s8
  $region1: #{_mlp_forward_impl.1} parent=0
    #allocation2 [shape = 'u8[262144]{0}', space=vmem, size = 0x40000, scoped, tag = 'input window, operand 1, single buffered']
    #allocation3 [shape = 's32[1]{0}', space=sflag, size = 0x4, scoped, tag = 'scoped memory for _mlp_forward_impl.1']
    #allocation4 [shape = 'u8[524288]{0}', space=vmem, size = 0x80000, scoped, tag = 'input window, operand 3, single buffered']
    #allocation5 [shape = 's32[1]{0}', space=sflag, size = 0x4, scoped, tag = 'scoped memory for _mlp_forward_impl.1']
    #allocation6 [shape = 'u8[131072]{0}', space=vmem, size = 0x20000, scoped, tag = 'input window, operand 5, single buffered']
    %12 = vsyncpa [#allocation3], 0
    %13 = vsyncpa [#allocation5], 0
    // Predicated region
    $region2: #{_mlp_forward_impl.1} parent=1 // pred_check
      _
    $region3: #{_mlp_forward_impl.1} parent=1 // pred_check_branch
      %15 = sbr.rel (0) target = $region5
    $region4: #{_mlp_forward_impl.1} parent=1 // pred_region
      _
    $region5: #{_mlp_forward_impl.1} parent=1 // pred_fallthru
      _
    // Predicated region
    $region6: #{_mlp_forward_impl.1} parent=1 // pred_check
      _
    $region7: #{_mlp_forward_impl.1} parent=1 // pred_check_branch
      %17 = sbr.rel (0) target = $region9
    $region8: #{_mlp_forward_impl.1} parent=1 // pred_region
      %s19 = ssub.s32 8192, 8192
      %20 = vsyncadd [#allocation3], %s19
      %s21 = sshll.u32 [#allocation2], 4
      %s22 = int_to_ptr.vmem [resolvable:$true] %s21
      %27 = dma.hbm_to_vmem [thread:$0]  %s1, 8192, %s22, [#allocation3], 256, 256, 16
    $region9: #{_mlp_forward_impl.1} parent=1 // pred_fallthru
      _
    // Predicated region
    $region10: #{_mlp_forward_impl.1} parent=1 // pred_check
      _
    $region11: #{_mlp_forward_impl.1} parent=1 // pred_check_branch
      %29 = sbr.rel (0) target = $region13
    $region12: #{_mlp_forward_impl.1} parent=1 // pred_region
      _
    $region13: #{_mlp_forward_impl.1} parent=1 // pred_fallthru
      _
    // Predicated region
    $region14: #{_mlp_forward_impl.1} parent=1 // pred_check
      _
    $region15: #{_mlp_forward_impl.1} parent=1 // pred_check_branch
      %31 = sbr.rel (0) target = $region17
    $region16: #{_mlp_forward_impl.1} parent=1 // pred_region
      %s33 = ssub.s32 16384, 16384
      %34 = vsyncadd [#allocation5], %s33
      %s35 = sshll.u32 [#allocation4], 4
      %s36 = int_to_ptr.vmem [resolvable:$true] %s35
      %41 = dma.hbm_to_vmem [thread:$0]  %s3, 16384, %s36, [#allocation5], 256, 256, 16
    $region17: #{_mlp_forward_impl.1} parent=1 // pred_fallthru
      _
    // Predicated region
    $region18: #{_mlp_forward_impl.1} parent=1 // pred_check
      _
    $region19: #{_mlp_forward_impl.1} parent=1 // pred_check_branch
      %43 = sbr.rel (0) target = $region21
    $region20: #{_mlp_forward_impl.1} parent=1 // pred_region
      _
    $region21: #{_mlp_forward_impl.1} parent=1 // pred_fallthru
      _
    // Predicated region
    $region22: #{_mlp_forward_impl.1} parent=1 // pred_check
      _
    $region23: #{_mlp_forward_impl.1} parent=1 // pred_check_branch
      %45 = sbr.rel (0) target = $region25
    $region24: #{_mlp_forward_impl.1} parent=1 // pred_region
      %s47 = ssub.s32 4096, 4096
      %48 = vsyncadd [#allocation5], %s47
      %s49 = sshll.u32 [#allocation6], 4
      %s50 = int_to_ptr.vmem [resolvable:$true] %s49
      %55 = dma.hbm_to_vmem [thread:$0]  %s5, 4096, %s50, [#allocation5], 64, 64, 4
    $region25: #{_mlp_forward_impl.1} parent=1 // pred_fallthru
      _
    // Predicated region
    $region26: #{_mlp_forward_impl.1} parent=1 // pred_check
      _
    $region27: #{_mlp_forward_impl.1} parent=1 // pred_check_branch
      %57 = sbr.rel (0) target = $region29
    $region28: #{_mlp_forward_impl.1} parent=1 // pred_region
      _
    $region29: #{_mlp_forward_impl.1} parent=1 // pred_fallthru
      _
    // Predicated region
    $region30: #{_mlp_forward_impl.1} parent=1 // pred_check
      _
    $region31: #{_mlp_forward_impl.1} parent=1 // pred_check_branch
      %59 = sbr.rel (0) target = $region33
    $region32: #{_mlp_forward_impl.1} parent=1 // pred_region
      %60 = dma.done [#allocation3], 8192
    $region33: #{_mlp_forward_impl.1} parent=1 // pred_fallthru
      _
    // Predicated region
    $region34: #{_mlp_forward_impl.1} parent=1 // pred_check
      _
    $region35: #{_mlp_forward_impl.1} parent=1 // pred_check_branch
      %62 = sbr.rel (0) target = $region37
    $region36: #{_mlp_forward_impl.1} parent=1 // pred_region
      %63 = dma.done [#allocation5], 16384
    $region37: #{_mlp_forward_impl.1} parent=1 // pred_fallthru
      _
    // Predicated region
    $region38: #{_mlp_forward_impl.1} parent=1 // pred_check
      _
    $region39: #{_mlp_forward_impl.1} parent=1 // pred_check_branch
      %65 = sbr.rel (0) target = $region41
    $region40: #{_mlp_forward_impl.1} parent=1 // pred_region
      %66 = dma.done [#allocation5], 4096
    $region41: #{_mlp_forward_impl.1} parent=1 // pred_fallthru
      _
    %v68 = vld [vmem:[%s0] sm:$0x3]
    %v70 = vlaneseq
    %v71 = vshrl.u32 %v70, 7
    %v72 = vsub.s32 0, %v71
    %v73 = vrot.slane %v68, %v72
    %v74 = vlaneseq
    %v75 = vshrl.u32 %v74, 7
    %v76 = vsub.s32 1, %v75
    %v77 = vrot.slane %v68, %v76
    %v80 = vpack.c.bf16 %v73, %v73
    %v81 = vpack.c.bf16 %v77, %v77
    %v82 = vld [vmem:[#allocation2] sm:$0xff]
    %v83 = vld [vmem:[#allocation2 + $0x8] sm:$0xff]
    %v84 = vld [vmem:[#allocation2 + $0x10] sm:$0xff]
    %v85 = vld [vmem:[#allocation2 + $0x18] sm:$0xff]
    %v86 = vld [vmem:[#allocation2 + $0x20] sm:$0xff]
    %v87 = vld [vmem:[#allocation2 + $0x28] sm:$0xff]
    %v88 = vld [vmem:[#allocation2 + $0x30] sm:$0xff]
    %v89 = vld [vmem:[#allocation2 + $0x38] sm:$0xff]
    %v90 = vld [vmem:[#allocation2 + $0x40] sm:$0xff]
    %v91 = vld [vmem:[#allocation2 + $0x48] sm:$0xff]
    %v92 = vld [vmem:[#allocation2 + $0x50] sm:$0xff]
    %v93 = vld [vmem:[#allocation2 + $0x58] sm:$0xff]
    %v94 = vld [vmem:[#allocation2 + $0x60] sm:$0xff]
    %v95 = vld [vmem:[#allocation2 + $0x68] sm:$0xff]
    %v96 = vld [vmem:[#allocation2 + $0x70] sm:$0xff]
    %v97 = vld [vmem:[#allocation2 + $0x78] sm:$0xff]
    %v98 = vld [vmem:[#allocation2 + $0x80] sm:$0xff]
    %v99 = vld [vmem:[#allocation2 + $0x88] sm:$0xff]
    %v100 = vld [vmem:[#allocation2 + $0x90] sm:$0xff]
    %v101 = vld [vmem:[#allocation2 + $0x98] sm:$0xff]
    %v102 = vld [vmem:[#allocation2 + $0xa0] sm:$0xff]
    %v103 = vld [vmem:[#allocation2 + $0xa8] sm:$0xff]
    %v104 = vld [vmem:[#allocation2 + $0xb0] sm:$0xff]
    %v105 = vld [vmem:[#allocation2 + $0xb8] sm:$0xff]
    %v106 = vld [vmem:[#allocation2 + $0xc0] sm:$0xff]
    %v107 = vld [vmem:[#allocation2 + $0xc8] sm:$0xff]
    %v108 = vld [vmem:[#allocation2 + $0xd0] sm:$0xff]
    %v109 = vld [vmem:[#allocation2 + $0xd8] sm:$0xff]
    %v110 = vld [vmem:[#allocation2 + $0xe0] sm:$0xff]
    %v111 = vld [vmem:[#allocation2 + $0xe8] sm:$0xff]
    %v112 = vld [vmem:[#allocation2 + $0xf0] sm:$0xff]
    %v113 = vld [vmem:[#allocation2 + $0xf8] sm:$0xff]
    %v114 = vld [vmem:[#allocation2 + $0x100] sm:$0xff]
    %v115 = vld [vmem:[#allocation2 + $0x108] sm:$0xff]
    %v116 = vld [vmem:[#allocation2 + $0x110] sm:$0xff]
    %v117 = vld [vmem:[#allocation2 + $0x118] sm:$0xff]
    %v118 = vld [vmem:[#allocation2 + $0x120] sm:$0xff]
    %v119 = vld [vmem:[#allocation2 + $0x128] sm:$0xff]
    %v120 = vld [vmem:[#allocation2 + $0x130] sm:$0xff]
    %v121 = vld [vmem:[#allocation2 + $0x138] sm:$0xff]
    %v122 = vld [vmem:[#allocation2 + $0x140] sm:$0xff]
    %v123 = vld [vmem:[#allocation2 + $0x148] sm:$0xff]
    %v124 = vld [vmem:[#allocation2 + $0x150] sm:$0xff]
    %v125 = vld [vmem:[#allocation2 + $0x158] sm:$0xff]
    %v126 = vld [vmem:[#allocation2 + $0x160] sm:$0xff]
    %v127 = vld [vmem:[#allocation2 + $0x168] sm:$0xff]
    %v128 = vld [vmem:[#allocation2 + $0x170] sm:$0xff]
    %v129 = vld [vmem:[#allocation2 + $0x178] sm:$0xff]
    %v130 = vld [vmem:[#allocation2 + $0x180] sm:$0xff]
    %v131 = vld [vmem:[#allocation2 + $0x188] sm:$0xff]
    %v132 = vld [vmem:[#allocation2 + $0x190] sm:$0xff]
    %v133 = vld [vmem:[#allocation2 + $0x198] sm:$0xff]
    %v134 = vld [vmem:[#allocation2 + $0x1a0] sm:$0xff]
    %v135 = vld [vmem:[#allocation2 + $0x1a8] sm:$0xff]
    %v136 = vld [vmem:[#allocation2 + $0x1b0] sm:$0xff]
    %v137 = vld [vmem:[#allocation2 + $0x1b8] sm:$0xff]
    %v138 = vld [vmem:[#allocation2 + $0x1c0] sm:$0xff]
    %v139 = vld [vmem:[#allocation2 + $0x1c8] sm:$0xff]
    %v140 = vld [vmem:[#allocation2 + $0x1d0] sm:$0xff]
    %v141 = vld [vmem:[#allocation2 + $0x1d8] sm:$0xff]
    %v142 = vld [vmem:[#allocation2 + $0x1e0] sm:$0xff]
    %v143 = vld [vmem:[#allocation2 + $0x1e8] sm:$0xff]
    %v144 = vld [vmem:[#allocation2 + $0x1f0] sm:$0xff]
    %v145 = vld [vmem:[#allocation2 + $0x1f8] sm:$0xff]
    %v146 = vld [vmem:[%s2] sm:$0xf]
    %v211 = vunpack.c.l.b16 %v82
    %v212 = vunpack.c.h.b16 %v82
    %v213 = vunpack.c.l.b16 %v83
    %v214 = vunpack.c.h.b16 %v83
    %v215 = vunpack.c.l.b16 %v84
    %v216 = vunpack.c.h.b16 %v84
    %v217 = vunpack.c.l.b16 %v85
    %v218 = vunpack.c.h.b16 %v85
    %v219 = vunpack.c.l.b16 %v86
    %v220 = vunpack.c.h.b16 %v86
    %v221 = vunpack.c.l.b16 %v87
    %v222 = vunpack.c.h.b16 %v87
    %v223 = vunpack.c.l.b16 %v88
    %v224 = vunpack.c.h.b16 %v88
    %v225 = vunpack.c.l.b16 %v89
    %v226 = vunpack.c.h.b16 %v89
    %v227 = vunpack.c.l.b16 %v90
    %v228 = vunpack.c.h.b16 %v90
    %v229 = vunpack.c.l.b16 %v91
    %v230 = vunpack.c.h.b16 %v91
    %v231 = vunpack.c.l.b16 %v92
    %v232 = vunpack.c.h.b16 %v92
    %v233 = vunpack.c.l.b16 %v93
    %v234 = vunpack.c.h.b16 %v93
    %v235 = vunpack.c.l.b16 %v94
    %v236 = vunpack.c.h.b16 %v94
    %v237 = vunpack.c.l.b16 %v95
    %v238 = vunpack.c.h.b16 %v95
    %v239 = vunpack.c.l.b16 %v96
    %v240 = vunpack.c.h.b16 %v96
    %v241 = vunpack.c.l.b16 %v97
    %v242 = vunpack.c.h.b16 %v97
    %v243 = vunpack.c.l.b16 %v98
    %v244 = vunpack.c.h.b16 %v98
    %v245 = vunpack.c.l.b16 %v99
    %v246 = vunpack.c.h.b16 %v99
    %v247 = vunpack.c.l.b16 %v100
    %v248 = vunpack.c.h.b16 %v100
    %v249 = vunpack.c.l.b16 %v101
    %v250 = vunpack.c.h.b16 %v101
    %v251 = vunpack.c.l.b16 %v102
    %v252 = vunpack.c.h.b16 %v102
    %v253 = vunpack.c.l.b16 %v103
    %v254 = vunpack.c.h.b16 %v103
    %v255 = vunpack.c.l.b16 %v104
    %v256 = vunpack.c.h.b16 %v104
    %v257 = vunpack.c.l.b16 %v105
    %v258 = vunpack.c.h.b16 %v105
    %v259 = vunpack.c.l.b16 %v106
    %v260 = vunpack.c.h.b16 %v106
    %v261 = vunpack.c.l.b16 %v107
    %v262 = vunpack.c.h.b16 %v107
    %v263 = vunpack.c.l.b16 %v108
    %v264 = vunpack.c.h.b16 %v108
    %v265 = vunpack.c.l.b16 %v109
    %v266 = vunpack.c.h.b16 %v109
    %v267 = vunpack.c.l.b16 %v110
    %v268 = vunpack.c.h.b16 %v110
    %v269 = vunpack.c.l.b16 %v111
    %v270 = vunpack.c.h.b16 %v111
    %v271 = vunpack.c.l.b16 %v112
    %v272 = vunpack.c.h.b16 %v112
    %v273 = vunpack.c.l.b16 %v113
    %v274 = vunpack.c.h.b16 %v113
    %v275 = vunpack.c.l.b16 %v114
    %v276 = vunpack.c.h.b16 %v114
    %v277 = vunpack.c.l.b16 %v115
    %v278 = vunpack.c.h.b16 %v115
    %v279 = vunpack.c.l.b16 %v116
    %v280 = vunpack.c.h.b16 %v116
    %v281 = vunpack.c.l.b16 %v117
    %v282 = vunpack.c.h.b16 %v117
    %v283 = vunpack.c.l.b16 %v118
    %v284 = vunpack.c.h.b16 %v118
    %v285 = vunpack.c.l.b16 %v119
    %v286 = vunpack.c.h.b16 %v119
    %v287 = vunpack.c.l.b16 %v120
    %v288 = vunpack.c.h.b16 %v120
    %v289 = vunpack.c.l.b16 %v121
    %v290 = vunpack.c.h.b16 %v121
    %v291 = vunpack.c.l.b16 %v122
    %v292 = vunpack.c.h.b16 %v122
    %v293 = vunpack.c.l.b16 %v123
    %v294 = vunpack.c.h.b16 %v123
    %v295 = vunpack.c.l.b16 %v124
    %v296 = vunpack.c.h.b16 %v124
    %v297 = vunpack.c.l.b16 %v125
    %v298 = vunpack.c.h.b16 %v125
    %v299 = vunpack.c.l.b16 %v126
    %v300 = vunpack.c.h.b16 %v126
    %v301 = vunpack.c.l.b16 %v127
    %v302 = vunpack.c.h.b16 %v127
    %v303 = vunpack.c.l.b16 %v128
    %v304 = vunpack.c.h.b16 %v128
    %v305 = vunpack.c.l.b16 %v129
    %v306 = vunpack.c.h.b16 %v129
    %v307 = vunpack.c.l.b16 %v130
    %v308 = vunpack.c.h.b16 %v130
    %v309 = vunpack.c.l.b16 %v131
    %v310 = vunpack.c.h.b16 %v131
    %v311 = vunpack.c.l.b16 %v132
    %v312 = vunpack.c.h.b16 %v132
    %v313 = vunpack.c.l.b16 %v133
    %v314 = vunpack.c.h.b16 %v133
    %v315 = vunpack.c.l.b16 %v134
    %v316 = vunpack.c.h.b16 %v134
    %v317 = vunpack.c.l.b16 %v135
    %v318 = vunpack.c.h.b16 %v135
    %v319 = vunpack.c.l.b16 %v136
    %v320 = vunpack.c.h.b16 %v136
    %v321 = vunpack.c.l.b16 %v137
    %v322 = vunpack.c.h.b16 %v137
    %v323 = vunpack.c.l.b16 %v138
    %v324 = vunpack.c.h.b16 %v138
    %v325 = vunpack.c.l.b16 %v139
    %v326 = vunpack.c.h.b16 %v139
    %v327 = vunpack.c.l.b16 %v140
    %v328 = vunpack.c.h.b16 %v140
    %v329 = vunpack.c.l.b16 %v141
    %v330 = vunpack.c.h.b16 %v141
    %v331 = vunpack.c.l.b16 %v142
    %v332 = vunpack.c.h.b16 %v142
    %v333 = vunpack.c.l.b16 %v143
    %v334 = vunpack.c.h.b16 %v143
    %v335 = vunpack.c.l.b16 %v144
    %v336 = vunpack.c.h.b16 %v144
    %v337 = vunpack.c.l.b16 %v145
    %v338 = vunpack.c.h.b16 %v145
    %v339 = vpack.c.b16 %v215, %v211
    %v340 = vpack.c.b16 %v216, %v212
    %v341 = vpack.c.b16 %v217, %v213
    %v342 = vpack.c.b16 %v218, %v214
    %v343 = vpack.c.b16 %v223, %v219
    %v344 = vpack.c.b16 %v224, %v220
    %v345 = vpack.c.b16 %v225, %v221
    %v346 = vpack.c.b16 %v226, %v222
    %v347 = vpack.c.b16 %v231, %v227
    %v348 = vpack.c.b16 %v232, %v228
    %v349 = vpack.c.b16 %v233, %v229
    %v350 = vpack.c.b16 %v234, %v230
    %v351 = vpack.c.b16 %v239, %v235
    %v352 = vpack.c.b16 %v240, %v236
    %v353 = vpack.c.b16 %v241, %v237
    %v354 = vpack.c.b16 %v242, %v238
    %v355 = vpack.c.b16 %v247, %v243
    %v356 = vpack.c.b16 %v248, %v244
    %v357 = vpack.c.b16 %v249, %v245
    %v358 = vpack.c.b16 %v250, %v246
    %v359 = vpack.c.b16 %v255, %v251
    %v360 = vpack.c.b16 %v256, %v252
    %v361 = vpack.c.b16 %v257, %v253
    %v362 = vpack.c.b16 %v258, %v254
    %v363 = vpack.c.b16 %v263, %v259
    %v364 = vpack.c.b16 %v264, %v260
    %v365 = vpack.c.b16 %v265, %v261
    %v366 = vpack.c.b16 %v266, %v262
    %v367 = vpack.c.b16 %v271, %v267
    %v368 = vpack.c.b16 %v272, %v268
    %v369 = vpack.c.b16 %v273, %v269
    %v370 = vpack.c.b16 %v274, %v270
    %v371 = vpack.c.b16 %v279, %v275
    %v372 = vpack.c.b16 %v280, %v276
    %v373 = vpack.c.b16 %v281, %v277
    %v374 = vpack.c.b16 %v282, %v278
    %v375 = vpack.c.b16 %v287, %v283
    %v376 = vpack.c.b16 %v288, %v284
    %v377 = vpack.c.b16 %v289, %v285
    %v378 = vpack.c.b16 %v290, %v286
    %v379 = vpack.c.b16 %v295, %v291
    %v380 = vpack.c.b16 %v296, %v292
    %v381 = vpack.c.b16 %v297, %v293
    %v382 = vpack.c.b16 %v298, %v294
    %v383 = vpack.c.b16 %v303, %v299
    %v384 = vpack.c.b16 %v304, %v300
    %v385 = vpack.c.b16 %v305, %v301
    %v386 = vpack.c.b16 %v306, %v302
    %v387 = vpack.c.b16 %v311, %v307
    %v388 = vpack.c.b16 %v312, %v308
    %v389 = vpack.c.b16 %v313, %v309
    %v390 = vpack.c.b16 %v314, %v310
    %v391 = vpack.c.b16 %v319, %v315
    %v392 = vpack.c.b16 %v320, %v316
    %v393 = vpack.c.b16 %v321, %v317
    %v394 = vpack.c.b16 %v322, %v318
    %v395 = vpack.c.b16 %v327, %v323
    %v396 = vpack.c.b16 %v328, %v324
    %v397 = vpack.c.b16 %v329, %v325
    %v398 = vpack.c.b16 %v330, %v326
    %v399 = vpack.c.b16 %v335, %v331
    %v400 = vpack.c.b16 %v336, %v332
    %v401 = vpack.c.b16 %v337, %v333
    %v402 = vpack.c.b16 %v338, %v334
    %v468 = vlaneseq
    %v469 = vshrl.u32 %v468, 7
    %v470 = vsub.s32 0, %v469
    %v471 = vrot.slane %v146, %v470
    %v472 = vlaneseq
    %v473 = vshrl.u32 %v472, 7
    %v474 = vsub.s32 1, %v473
    %v475 = vrot.slane %v146, %v474
    %v476 = vlaneseq
    %v477 = vshrl.u32 %v476, 7
    %v478 = vsub.s32 2, %v477
    %v479 = vrot.slane %v146, %v478
    %v480 = vlaneseq
    %v481 = vshrl.u32 %v480, 7
    %v482 = vsub.s32 3, %v481
    %v483 = vrot.slane %v146, %v482
    %488 = vmatprep.subr.bf16.mxu0 %v368
    %489 = vmatpush1.bf16.msra.mxu0 %v367
    %490 = vmatprep.subr.bf16.mxu0 %v364
    %491 = vmatpush1.bf16.msra.mxu0 %v363
    %492 = vmatprep.subr.bf16.mxu0 %v360
    %493 = vmatpush1.bf16.msra.mxu0 %v359
    %494 = vmatprep.subr.bf16.mxu0 %v356
    %495 = vmatpush1.bf16.msra.mxu0 %v355
    %496 = vmatprep.subr.bf16.mxu0 %v352
    %497 = vmatpush1.bf16.msra.mxu0 %v351
    %498 = vmatprep.subr.bf16.mxu0 %v348
    %499 = vmatpush1.bf16.msra.mxu0 %v347
    %500 = vmatprep.subr.bf16.mxu0 %v344
    %501 = vmatpush1.bf16.msra.mxu0 %v343
    %502 = vmatprep.subr.bf16.mxu0 %v340
    %503 = vmatpush1.bf16.msra.mxu0 %v339
    %504 = vmatprep.subr.bf16.mxu0 %v400
    %505 = vmatpush2.bf16.msra.mxu0 %v399
    %506 = vmatprep.subr.bf16.mxu0 %v396
    %507 = vmatpush2.bf16.msra.mxu0 %v395
    %508 = vmatprep.subr.bf16.mxu0 %v392
    %509 = vmatpush2.bf16.msra.mxu0 %v391
    %510 = vmatprep.subr.bf16.mxu0 %v388
    %511 = vmatpush2.bf16.msra.mxu0 %v387
    %512 = vmatprep.subr.bf16.mxu0 %v384
    %513 = vmatpush2.bf16.msra.mxu0 %v383
    %514 = vmatprep.subr.bf16.mxu0 %v380
    %515 = vmatpush2.bf16.msra.mxu0 %v379
    %516 = vmatprep.subr.bf16.mxu0 %v376
    %517 = vmatpush2.bf16.msra.mxu0 %v375
    %518 = vmatprep.subr.bf16.mxu0 %v372
    %519 = vmatpush2.bf16.msra.mxu0 %v371
    %520 = vmatprep.mubr.bf16.mxu0 %v81
    %521 = vmatmul.mubr.bf16.gmra.mxu0 %v80
    %v522 = vpop.f32.mrf.mxu0
    %v523 = vadd.f32 %v471, %v522
    %v524 = vpop.f32.mrf.mxu0
    %v525 = vadd.f32 %v475, %v524
    %v526 = vpop.f32.mrf.mxu0
    %v527 = vpop.f32.mrf.mxu0
    %528 = vdwg.mxu0
    %529 = vmatprep.subr.bf16.mxu0 %v370
    %530 = vmatpush1.bf16.msra.mxu0 %v369
    %531 = vmatprep.subr.bf16.mxu0 %v366
    %532 = vmatpush1.bf16.msra.mxu0 %v365
    %533 = vmatprep.subr.bf16.mxu0 %v362
    %534 = vmatpush1.bf16.msra.mxu0 %v361
    %535 = vmatprep.subr.bf16.mxu0 %v358
    %536 = vmatpush1.bf16.msra.mxu0 %v357
    %537 = vmatprep.subr.bf16.mxu0 %v354
    %538 = vmatpush1.bf16.msra.mxu0 %v353
    %539 = vmatprep.subr.bf16.mxu0 %v350
    %540 = vmatpush1.bf16.msra.mxu0 %v349
    %541 = vmatprep.subr.bf16.mxu0 %v346
    %542 = vmatpush1.bf16.msra.mxu0 %v345
    %543 = vmatprep.subr.bf16.mxu0 %v342
    %544 = vmatpush1.bf16.msra.mxu0 %v341
    %545 = vmatprep.subr.bf16.mxu0 %v402
    %546 = vmatpush2.bf16.msra.mxu0 %v401
    %547 = vmatprep.subr.bf16.mxu0 %v398
    %548 = vmatpush2.bf16.msra.mxu0 %v397
    %549 = vmatprep.subr.bf16.mxu0 %v394
    %550 = vmatpush2.bf16.msra.mxu0 %v393
    %551 = vmatprep.subr.bf16.mxu0 %v390
    %552 = vmatpush2.bf16.msra.mxu0 %v389
    %553 = vmatprep.subr.bf16.mxu0 %v386
    %554 = vmatpush2.bf16.msra.mxu0 %v385
    %555 = vmatprep.subr.bf16.mxu0 %v382
    %556 = vmatpush2.bf16.msra.mxu0 %v381
    %557 = vmatprep.subr.bf16.mxu0 %v378
    %558 = vmatpush2.bf16.msra.mxu0 %v377
    %559 = vmatprep.subr.bf16.mxu0 %v374
    %560 = vmatpush2.bf16.msra.mxu0 %v373
    %561 = vmatprep.mubr.bf16.mxu0 %v81
    %562 = vmatmul.mubr.bf16.gmra.mxu0 %v80
    %v563 = vpop.f32.mrf.mxu0
    %v564 = vadd.f32 %v479, %v563
    %v565 = vpop.f32.mrf.mxu0
    %v566 = vadd.f32 %v483, %v565
    %v567 = vpop.f32.mrf.mxu0
    %v568 = vpop.f32.mrf.mxu0
    %569 = vdwg.mxu0
    %v570 = vmax.f32 %v523, 0.0
    %v571 = vmax.f32 %v525, 0.0
    %v572 = vmax.f32 %v564, 0.0
    %v573 = vmax.f32 %v566, 0.0
    %v574 = vpack.c.bf16 %v570, %v570
    %v575 = vpack.c.bf16 %v571, %v571
    %v576 = vpack.c.bf16 %v572, %v572
    %v577 = vpack.c.bf16 %v573, %v573
    %v578 = vld [vmem:[#allocation4] sm:$0xff]
    %v579 = vld [vmem:[#allocation4 + $0x8] sm:$0xff]
    %v580 = vld [vmem:[#allocation4 + $0x10] sm:$0xff]
    %v581 = vld [vmem:[#allocation4 + $0x18] sm:$0xff]
    %v582 = vld [vmem:[#allocation4 + $0x20] sm:$0xff]
    %v583 = vld [vmem:[#allocation4 + $0x28] sm:$0xff]
    %v584 = vld [vmem:[#allocation4 + $0x30] sm:$0xff]
    %v585 = vld [vmem:[#allocation4 + $0x38] sm:$0xff]
    %v586 = vld [vmem:[#allocation4 + $0x40] sm:$0xff]
    %v587 = vld [vmem:[#allocation4 + $0x48] sm:$0xff]
    %v588 = vld [vmem:[#allocation4 + $0x50] sm:$0xff]
    %v589 = vld [vmem:[#allocation4 + $0x58] sm:$0xff]
    %v590 = vld [vmem:[#allocation4 + $0x60] sm:$0xff]
    %v591 = vld [vmem:[#allocation4 + $0x68] sm:$0xff]
    %v592 = vld [vmem:[#allocation4 + $0x70] sm:$0xff]
    %v593 = vld [vmem:[#allocation4 + $0x78] sm:$0xff]
    %v594 = vld [vmem:[#allocation4 + $0x80] sm:$0xff]
    %v595 = vld [vmem:[#allocation4 + $0x88] sm:$0xff]
    %v596 = vld [vmem:[#allocation4 + $0x90] sm:$0xff]
    %v597 = vld [vmem:[#allocation4 + $0x98] sm:$0xff]
    %v598 = vld [vmem:[#allocation4 + $0xa0] sm:$0xff]
    %v599 = vld [vmem:[#allocation4 + $0xa8] sm:$0xff]
    %v600 = vld [vmem:[#allocation4 + $0xb0] sm:$0xff]
    %v601 = vld [vmem:[#allocation4 + $0xb8] sm:$0xff]
    %v602 = vld [vmem:[#allocation4 + $0xc0] sm:$0xff]
    %v603 = vld [vmem:[#allocation4 + $0xc8] sm:$0xff]
    %v604 = vld [vmem:[#allocation4 + $0xd0] sm:$0xff]
    %v605 = vld [vmem:[#allocation4 + $0xd8] sm:$0xff]
    %v606 = vld [vmem:[#allocation4 + $0xe0] sm:$0xff]
    %v607 = vld [vmem:[#allocation4 + $0xe8] sm:$0xff]
    %v608 = vld [vmem:[#allocation4 + $0xf0] sm:$0xff]
    %v609 = vld [vmem:[#allocation4 + $0xf8] sm:$0xff]
    %v610 = vld [vmem:[#allocation4 + $0x100] sm:$0xff]
    %v611 = vld [vmem:[#allocation4 + $0x108] sm:$0xff]
    %v612 = vld [vmem:[#allocation4 + $0x110] sm:$0xff]
    %v613 = vld [vmem:[#allocation4 + $0x118] sm:$0xff]
    %v614 = vld [vmem:[#allocation4 + $0x120] sm:$0xff]
    %v615 = vld [vmem:[#allocation4 + $0x128] sm:$0xff]
    %v616 = vld [vmem:[#allocation4 + $0x130] sm:$0xff]
    %v617 = vld [vmem:[#allocation4 + $0x138] sm:$0xff]
    %v618 = vld [vmem:[#allocation4 + $0x140] sm:$0xff]
    %v619 = vld [vmem:[#allocation4 + $0x148] sm:$0xff]
    %v620 = vld [vmem:[#allocation4 + $0x150] sm:$0xff]
    %v621 = vld [vmem:[#allocation4 + $0x158] sm:$0xff]
    %v622 = vld [vmem:[#allocation4 + $0x160] sm:$0xff]
    %v623 = vld [vmem:[#allocation4 + $0x168] sm:$0xff]
    %v624 = vld [vmem:[#allocation4 + $0x170] sm:$0xff]
    %v625 = vld [vmem:[#allocation4 + $0x178] sm:$0xff]
    %v626 = vld [vmem:[#allocation4 + $0x180] sm:$0xff]
    %v627 = vld [vmem:[#allocation4 + $0x188] sm:$0xff]
    %v628 = vld [vmem:[#allocation4 + $0x190] sm:$0xff]
    %v629 = vld [vmem:[#allocation4 + $0x198] sm:$0xff]
    %v630 = vld [vmem:[#allocation4 + $0x1a0] sm:$0xff]
    %v631 = vld [vmem:[#allocation4 + $0x1a8] sm:$0xff]
    %v632 = vld [vmem:[#allocation4 + $0x1b0] sm:$0xff]
    %v633 = vld [vmem:[#allocation4 + $0x1b8] sm:$0xff]
    %v634 = vld [vmem:[#allocation4 + $0x1c0] sm:$0xff]
    %v635 = vld [vmem:[#allocation4 + $0x1c8] sm:$0xff]
    %v636 = vld [vmem:[#allocation4 + $0x1d0] sm:$0xff]
    %v637 = vld [vmem:[#allocation4 + $0x1d8] sm:$0xff]
    %v638 = vld [vmem:[#allocation4 + $0x1e0] sm:$0xff]
    %v639 = vld [vmem:[#allocation4 + $0x1e8] sm:$0xff]
    %v640 = vld [vmem:[#allocation4 + $0x1f0] sm:$0xff]
    %v641 = vld [vmem:[#allocation4 + $0x1f8] sm:$0xff]
    %v642 = vld [vmem:[#allocation4 + $0x200] sm:$0xff]
    %v643 = vld [vmem:[#allocation4 + $0x208] sm:$0xff]
    %v644 = vld [vmem:[#allocation4 + $0x210] sm:$0xff]
    %v645 = vld [vmem:[#allocation4 + $0x218] sm:$0xff]
    %v646 = vld [vmem:[#allocation4 + $0x220] sm:$0xff]
    %v647 = vld [vmem:[#allocation4 + $0x228] sm:$0xff]
    %v648 = vld [vmem:[#allocation4 + $0x230] sm:$0xff]
    %v649 = vld [vmem:[#allocation4 + $0x238] sm:$0xff]
    %v650 = vld [vmem:[#allocation4 + $0x240] sm:$0xff]
    %v651 = vld [vmem:[#allocation4 + $0x248] sm:$0xff]
    %v652 = vld [vmem:[#allocation4 + $0x250] sm:$0xff]
    %v653 = vld [vmem:[#allocation4 + $0x258] sm:$0xff]
    %v654 = vld [vmem:[#allocation4 + $0x260] sm:$0xff]
    %v655 = vld [vmem:[#allocation4 + $0x268] sm:$0xff]
    %v656 = vld [vmem:[#allocation4 + $0x270] sm:$0xff]
    %v657 = vld [vmem:[#allocation4 + $0x278] sm:$0xff]
    %v658 = vld [vmem:[#allocation4 + $0x280] sm:$0xff]
    %v659 = vld [vmem:[#allocation4 + $0x288] sm:$0xff]
    %v660 = vld [vmem:[#allocation4 + $0x290] sm:$0xff]
    %v661 = vld [vmem:[#allocation4 + $0x298] sm:$0xff]
    %v662 = vld [vmem:[#allocation4 + $0x2a0] sm:$0xff]
    %v663 = vld [vmem:[#allocation4 + $0x2a8] sm:$0xff]
    %v664 = vld [vmem:[#allocation4 + $0x2b0] sm:$0xff]
    %v665 = vld [vmem:[#allocation4 + $0x2b8] sm:$0xff]
    %v666 = vld [vmem:[#allocation4 + $0x2c0] sm:$0xff]
    %v667 = vld [vmem:[#allocation4 + $0x2c8] sm:$0xff]
    %v668 = vld [vmem:[#allocation4 + $0x2d0] sm:$0xff]
    %v669 = vld [vmem:[#allocation4 + $0x2d8] sm:$0xff]
    %v670 = vld [vmem:[#allocation4 + $0x2e0] sm:$0xff]
    %v671 = vld [vmem:[#allocation4 + $0x2e8] sm:$0xff]
    %v672 = vld [vmem:[#allocation4 + $0x2f0] sm:$0xff]
    %v673 = vld [vmem:[#allocation4 + $0x2f8] sm:$0xff]
    %v674 = vld [vmem:[#allocation4 + $0x300] sm:$0xff]
    %v675 = vld [vmem:[#allocation4 + $0x308] sm:$0xff]
    %v676 = vld [vmem:[#allocation4 + $0x310] sm:$0xff]
    %v677 = vld [vmem:[#allocation4 + $0x318] sm:$0xff]
    %v678 = vld [vmem:[#allocation4 + $0x320] sm:$0xff]
    %v679 = vld [vmem:[#allocation4 + $0x328] sm:$0xff]
    %v680 = vld [vmem:[#allocation4 + $0x330] sm:$0xff]
    %v681 = vld [vmem:[#allocation4 + $0x338] sm:$0xff]
    %v682 = vld [vmem:[#allocation4 + $0x340] sm:$0xff]
    %v683 = vld [vmem:[#allocation4 + $0x348] sm:$0xff]
    %v684 = vld [vmem:[#allocation4 + $0x350] sm:$0xff]
    %v685 = vld [vmem:[#allocation4 + $0x358] sm:$0xff]
    %v686 = vld [vmem:[#allocation4 + $0x360] sm:$0xff]
    %v687 = vld [vmem:[#allocation4 + $0x368] sm:$0xff]
    %v688 = vld [vmem:[#allocation4 + $0x370] sm:$0xff]
    %v689 = vld [vmem:[#allocation4 + $0x378] sm:$0xff]
    %v690 = vld [vmem:[#allocation4 + $0x380] sm:$0xff]
    %v691 = vld [vmem:[#allocation4 + $0x388] sm:$0xff]
    %v692 = vld [vmem:[#allocation4 + $0x390] sm:$0xff]
    %v693 = vld [vmem:[#allocation4 + $0x398] sm:$0xff]
    %v694 = vld [vmem:[#allocation4 + $0x3a0] sm:$0xff]
    %v695 = vld [vmem:[#allocation4 + $0x3a8] sm:$0xff]
    %v696 = vld [vmem:[#allocation4 + $0x3b0] sm:$0xff]
    %v697 = vld [vmem:[#allocation4 + $0x3b8] sm:$0xff]
    %v698 = vld [vmem:[#allocation4 + $0x3c0] sm:$0xff]
    %v699 = vld [vmem:[#allocation4 + $0x3c8] sm:$0xff]
    %v700 = vld [vmem:[#allocation4 + $0x3d0] sm:$0xff]
    %v701 = vld [vmem:[#allocation4 + $0x3d8] sm:$0xff]
    %v702 = vld [vmem:[#allocation4 + $0x3e0] sm:$0xff]
    %v703 = vld [vmem:[#allocation4 + $0x3e8] sm:$0xff]
    %v704 = vld [vmem:[#allocation4 + $0x3f0] sm:$0xff]
    %v705 = vld [vmem:[#allocation4 + $0x3f8] sm:$0xff]
    %v706 = vld [vmem:[%s4] sm:$0xf]
    %v835 = vunpack.c.l.b16 %v578
    %v836 = vunpack.c.h.b16 %v578
    %v837 = vunpack.c.l.b16 %v579
    %v838 = vunpack.c.h.b16 %v579
    %v839 = vunpack.c.l.b16 %v580
    %v840 = vunpack.c.h.b16 %v580
    %v841 = vunpack.c.l.b16 %v581
    %v842 = vunpack.c.h.b16 %v581
    %v843 = vunpack.c.l.b16 %v582
    %v844 = vunpack.c.h.b16 %v582
    %v845 = vunpack.c.l.b16 %v583
    %v846 = vunpack.c.h.b16 %v583
    %v847 = vunpack.c.l.b16 %v584
    %v848 = vunpack.c.h.b16 %v584
    %v849 = vunpack.c.l.b16 %v585
    %v850 = vunpack.c.h.b16 %v585
    %v851 = vunpack.c.l.b16 %v586
    %v852 = vunpack.c.h.b16 %v586
    %v853 = vunpack.c.l.b16 %v587
    %v854 = vunpack.c.h.b16 %v587
    %v855 = vunpack.c.l.b16 %v588
    %v856 = vunpack.c.h.b16 %v588
    %v857 = vunpack.c.l.b16 %v589
    %v858 = vunpack.c.h.b16 %v589
    %v859 = vunpack.c.l.b16 %v590
    %v860 = vunpack.c.h.b16 %v590
    %v861 = vunpack.c.l.b16 %v591
    %v862 = vunpack.c.h.b16 %v591
    %v863 = vunpack.c.l.b16 %v592
    %v864 = vunpack.c.h.b16 %v592
    %v865 = vunpack.c.l.b16 %v593
    %v866 = vunpack.c.h.b16 %v593
    %v867 = vunpack.c.l.b16 %v594
    %v868 = vunpack.c.h.b16 %v594
    %v869 = vunpack.c.l.b16 %v595
    %v870 = vunpack.c.h.b16 %v595
    %v871 = vunpack.c.l.b16 %v596
    %v872 = vunpack.c.h.b16 %v596
    %v873 = vunpack.c.l.b16 %v597
    %v874 = vunpack.c.h.b16 %v597
    %v875 = vunpack.c.l.b16 %v598
    %v876 = vunpack.c.h.b16 %v598
    %v877 = vunpack.c.l.b16 %v599
    %v878 = vunpack.c.h.b16 %v599
    %v879 = vunpack.c.l.b16 %v600
    %v880 = vunpack.c.h.b16 %v600
    %v881 = vunpack.c.l.b16 %v601
    %v882 = vunpack.c.h.b16 %v601
    %v883 = vunpack.c.l.b16 %v602
    %v884 = vunpack.c.h.b16 %v602
    %v885 = vunpack.c.l.b16 %v603
    %v886 = vunpack.c.h.b16 %v603
    %v887 = vunpack.c.l.b16 %v604
    %v888 = vunpack.c.h.b16 %v604
    %v889 = vunpack.c.l.b16 %v605
    %v890 = vunpack.c.h.b16 %v605
    %v891 = vunpack.c.l.b16 %v606
    %v892 = vunpack.c.h.b16 %v606
    %v893 = vunpack.c.l.b16 %v607
    %v894 = vunpack.c.h.b16 %v607
    %v895 = vunpack.c.l.b16 %v608
    %v896 = vunpack.c.h.b16 %v608
    %v897 = vunpack.c.l.b16 %v609
    %v898 = vunpack.c.h.b16 %v609
    %v899 = vunpack.c.l.b16 %v610
    %v900 = vunpack.c.h.b16 %v610
    %v901 = vunpack.c.l.b16 %v611
    %v902 = vunpack.c.h.b16 %v611
    %v903 = vunpack.c.l.b16 %v612
    %v904 = vunpack.c.h.b16 %v612
    %v905 = vunpack.c.l.b16 %v613
    %v906 = vunpack.c.h.b16 %v613
    %v907 = vunpack.c.l.b16 %v614
    %v908 = vunpack.c.h.b16 %v614
    %v909 = vunpack.c.l.b16 %v615
    %v910 = vunpack.c.h.b16 %v615
    %v911 = vunpack.c.l.b16 %v616
    %v912 = vunpack.c.h.b16 %v616
    %v913 = vunpack.c.l.b16 %v617
    %v914 = vunpack.c.h.b16 %v617
    %v915 = vunpack.c.l.b16 %v618
    %v916 = vunpack.c.h.b16 %v618
    %v917 = vunpack.c.l.b16 %v619
    %v918 = vunpack.c.h.b16 %v619
    %v919 = vunpack.c.l.b16 %v620
    %v920 = vunpack.c.h.b16 %v620
    %v921 = vunpack.c.l.b16 %v621
    %v922 = vunpack.c.h.b16 %v621
    %v923 = vunpack.c.l.b16 %v622
    %v924 = vunpack.c.h.b16 %v622
    %v925 = vunpack.c.l.b16 %v623
    %v926 = vunpack.c.h.b16 %v623
    %v927 = vunpack.c.l.b16 %v624
    %v928 = vunpack.c.h.b16 %v624
    %v929 = vunpack.c.l.b16 %v625
    %v930 = vunpack.c.h.b16 %v625
    %v931 = vunpack.c.l.b16 %v626
    %v932 = vunpack.c.h.b16 %v626
    %v933 = vunpack.c.l.b16 %v627
    %v934 = vunpack.c.h.b16 %v627
    %v935 = vunpack.c.l.b16 %v628
    %v936 = vunpack.c.h.b16 %v628
    %v937 = vunpack.c.l.b16 %v629
    %v938 = vunpack.c.h.b16 %v629
    %v939 = vunpack.c.l.b16 %v630
    %v940 = vunpack.c.h.b16 %v630
    %v941 = vunpack.c.l.b16 %v631
    %v942 = vunpack.c.h.b16 %v631
    %v943 = vunpack.c.l.b16 %v632
    %v944 = vunpack.c.h.b16 %v632
    %v945 = vunpack.c.l.b16 %v633
    %v946 = vunpack.c.h.b16 %v633
    %v947 = vunpack.c.l.b16 %v634
    %v948 = vunpack.c.h.b16 %v634
    %v949 = vunpack.c.l.b16 %v635
    %v950 = vunpack.c.h.b16 %v635
    %v951 = vunpack.c.l.b16 %v636
    %v952 = vunpack.c.h.b16 %v636
    %v953 = vunpack.c.l.b16 %v637
    %v954 = vunpack.c.h.b16 %v637
    %v955 = vunpack.c.l.b16 %v638
    %v956 = vunpack.c.h.b16 %v638
    %v957 = vunpack.c.l.b16 %v639
    %v958 = vunpack.c.h.b16 %v639
    %v959 = vunpack.c.l.b16 %v640
    %v960 = vunpack.c.h.b16 %v640
    %v961 = vunpack.c.l.b16 %v641
    %v962 = vunpack.c.h.b16 %v641
    %v963 = vunpack.c.l.b16 %v642
    %v964 = vunpack.c.h.b16 %v642
    %v965 = vunpack.c.l.b16 %v643
    %v966 = vunpack.c.h.b16 %v643
    %v967 = vunpack.c.l.b16 %v644
    %v968 = vunpack.c.h.b16 %v644
    %v969 = vunpack.c.l.b16 %v645
    %v970 = vunpack.c.h.b16 %v645
    %v971 = vunpack.c.l.b16 %v646
    %v972 = vunpack.c.h.b16 %v646
    %v973 = vunpack.c.l.b16 %v647
    %v974 = vunpack.c.h.b16 %v647
    %v975 = vunpack.c.l.b16 %v648
    %v976 = vunpack.c.h.b16 %v648
    %v977 = vunpack.c.l.b16 %v649
    %v978 = vunpack.c.h.b16 %v649
    %v979 = vunpack.c.l.b16 %v650
    %v980 = vunpack.c.h.b16 %v650
    %v981 = vunpack.c.l.b16 %v651
    %v982 = vunpack.c.h.b16 %v651
    %v983 = vunpack.c.l.b16 %v652
    %v984 = vunpack.c.h.b16 %v652
    %v985 = vunpack.c.l.b16 %v653
    %v986 = vunpack.c.h.b16 %v653
    %v987 = vunpack.c.l.b16 %v654
    %v988 = vunpack.c.h.b16 %v654
    %v989 = vunpack.c.l.b16 %v655
    %v990 = vunpack.c.h.b16 %v655
    %v991 = vunpack.c.l.b16 %v656
    %v992 = vunpack.c.h.b16 %v656
    %v993 = vunpack.c.l.b16 %v657
    %v994 = vunpack.c.h.b16 %v657
    %v995 = vunpack.c.l.b16 %v658
    %v996 = vunpack.c.h.b16 %v658
    %v997 = vunpack.c.l.b16 %v659
    %v998 = vunpack.c.h.b16 %v659
    %v999 = vunpack.c.l.b16 %v660
    %v1000 = vunpack.c.h.b16 %v660
    %v1001 = vunpack.c.l.b16 %v661
    %v1002 = vunpack.c.h.b16 %v661
    %v1003 = vunpack.c.l.b16 %v662
    %v1004 = vunpack.c.h.b16 %v662
    %v1005 = vunpack.c.l.b16 %v663
    %v1006 = vunpack.c.h.b16 %v663
    %v1007 = vunpack.c.l.b16 %v664
    %v1008 = vunpack.c.h.b16 %v664
    %v1009 = vunpack.c.l.b16 %v665
    %v1010 = vunpack.c.h.b16 %v665
    %v1011 = vunpack.c.l.b16 %v666
    %v1012 = vunpack.c.h.b16 %v666
    %v1013 = vunpack.c.l.b16 %v667
    %v1014 = vunpack.c.h.b16 %v667
    %v1015 = vunpack.c.l.b16 %v668
    %v1016 = vunpack.c.h.b16 %v668
    %v1017 = vunpack.c.l.b16 %v669
    %v1018 = vunpack.c.h.b16 %v669
    %v1019 = vunpack.c.l.b16 %v670
    %v1020 = vunpack.c.h.b16 %v670
    %v1021 = vunpack.c.l.b16 %v671
    %v1022 = vunpack.c.h.b16 %v671
    %v1023 = vunpack.c.l.b16 %v672
    %v1024 = vunpack.c.h.b16 %v672
    %v1025 = vunpack.c.l.b16 %v673
    %v1026 = vunpack.c.h.b16 %v673
    %v1027 = vunpack.c.l.b16 %v674
    %v1028 = vunpack.c.h.b16 %v674
    %v1029 = vunpack.c.l.b16 %v675
    %v1030 = vunpack.c.h.b16 %v675
    %v1031 = vunpack.c.l.b16 %v676
    %v1032 = vunpack.c.h.b16 %v676
    %v1033 = vunpack.c.l.b16 %v677
    %v1034 = vunpack.c.h.b16 %v677
    %v1035 = vunpack.c.l.b16 %v678
    %v1036 = vunpack.c.h.b16 %v678
    %v1037 = vunpack.c.l.b16 %v679
    %v1038 = vunpack.c.h.b16 %v679
    %v1039 = vunpack.c.l.b16 %v680
    %v1040 = vunpack.c.h.b16 %v680
    %v1041 = vunpack.c.l.b16 %v681
    %v1042 = vunpack.c.h.b16 %v681
    %v1043 = vunpack.c.l.b16 %v682
    %v1044 = vunpack.c.h.b16 %v682
    %v1045 = vunpack.c.l.b16 %v683
    %v1046 = vunpack.c.h.b16 %v683
    %v1047 = vunpack.c.l.b16 %v684
    %v1048 = vunpack.c.h.b16 %v684
    %v1049 = vunpack.c.l.b16 %v685
    %v1050 = vunpack.c.h.b16 %v685
    %v1051 = vunpack.c.l.b16 %v686
    %v1052 = vunpack.c.h.b16 %v686
    %v1053 = vunpack.c.l.b16 %v687
    %v1054 = vunpack.c.h.b16 %v687
    %v1055 = vunpack.c.l.b16 %v688
    %v1056 = vunpack.c.h.b16 %v688
    %v1057 = vunpack.c.l.b16 %v689
    %v1058 = vunpack.c.h.b16 %v689
    %v1059 = vunpack.c.l.b16 %v690
    %v1060 = vunpack.c.h.b16 %v690
    %v1061 = vunpack.c.l.b16 %v691
    %v1062 = vunpack.c.h.b16 %v691
    %v1063 = vunpack.c.l.b16 %v692
    %v1064 = vunpack.c.h.b16 %v692
    %v1065 = vunpack.c.l.b16 %v693
    %v1066 = vunpack.c.h.b16 %v693
    %v1067 = vunpack.c.l.b16 %v694
    %v1068 = vunpack.c.h.b16 %v694
    %v1069 = vunpack.c.l.b16 %v695
    %v1070 = vunpack.c.h.b16 %v695
    %v1071 = vunpack.c.l.b16 %v696
    %v1072 = vunpack.c.h.b16 %v696
    %v1073 = vunpack.c.l.b16 %v697
    %v1074 = vunpack.c.h.b16 %v697
    %v1075 = vunpack.c.l.b16 %v698
    %v1076 = vunpack.c.h.b16 %v698
    %v1077 = vunpack.c.l.b16 %v699
    %v1078 = vunpack.c.h.b16 %v699
    %v1079 = vunpack.c.l.b16 %v700
    %v1080 = vunpack.c.h.b16 %v700
    %v1081 = vunpack.c.l.b16 %v701
    %v1082 = vunpack.c.h.b16 %v701
    %v1083 = vunpack.c.l.b16 %v702
    %v1084 = vunpack.c.h.b16 %v702
    %v1085 = vunpack.c.l.b16 %v703
    %v1086 = vunpack.c.h.b16 %v703
    %v1087 = vunpack.c.l.b16 %v704
    %v1088 = vunpack.c.h.b16 %v704
    %v1089 = vunpack.c.l.b16 %v705
    %v1090 = vunpack.c.h.b16 %v705
    %v1091 = vpack.c.b16 %v839, %v835
    %v1092 = vpack.c.b16 %v840, %v836
    %v1093 = vpack.c.b16 %v841, %v837
    %v1094 = vpack.c.b16 %v842, %v838
    %v1095 = vpack.c.b16 %v847, %v843
    %v1096 = vpack.c.b16 %v848, %v844
    %v1097 = vpack.c.b16 %v849, %v845
    %v1098 = vpack.c.b16 %v850, %v846
    %v1099 = vpack.c.b16 %v855, %v851
    %v1100 = vpack.c.b16 %v856, %v852
    %v1101 = vpack.c.b16 %v857, %v853
    %v1102 = vpack.c.b16 %v858, %v854
    %v1103 = vpack.c.b16 %v863, %v859
    %v1104 = vpack.c.b16 %v864, %v860
    %v1105 = vpack.c.b16 %v865, %v861
    %v1106 = vpack.c.b16 %v866, %v862
    %v1107 = vpack.c.b16 %v871, %v867
    %v1108 = vpack.c.b16 %v872, %v868
    %v1109 = vpack.c.b16 %v873, %v869
    %v1110 = vpack.c.b16 %v874, %v870
    %v1111 = vpack.c.b16 %v879, %v875
    %v1112 = vpack.c.b16 %v880, %v876
    %v1113 = vpack.c.b16 %v881, %v877
    %v1114 = vpack.c.b16 %v882, %v878
    %v1115 = vpack.c.b16 %v887, %v883
    %v1116 = vpack.c.b16 %v888, %v884
    %v1117 = vpack.c.b16 %v889, %v885
    %v1118 = vpack.c.b16 %v890, %v886
    %v1119 = vpack.c.b16 %v895, %v891
    %v1120 = vpack.c.b16 %v896, %v892
    %v1121 = vpack.c.b16 %v897, %v893
    %v1122 = vpack.c.b16 %v898, %v894
    %v1123 = vpack.c.b16 %v903, %v899
    %v1124 = vpack.c.b16 %v904, %v900
    %v1125 = vpack.c.b16 %v905, %v901
    %v1126 = vpack.c.b16 %v906, %v902
    %v1127 = vpack.c.b16 %v911, %v907
    %v1128 = vpack.c.b16 %v912, %v908
    %v1129 = vpack.c.b16 %v913, %v909
    %v1130 = vpack.c.b16 %v914, %v910
    %v1131 = vpack.c.b16 %v919, %v915
    %v1132 = vpack.c.b16 %v920, %v916
    %v1133 = vpack.c.b16 %v921, %v917
    %v1134 = vpack.c.b16 %v922, %v918
    %v1135 = vpack.c.b16 %v927, %v923
    %v1136 = vpack.c.b16 %v928, %v924
    %v1137 = vpack.c.b16 %v929, %v925
    %v1138 = vpack.c.b16 %v930, %v926
    %v1139 = vpack.c.b16 %v935, %v931
    %v1140 = vpack.c.b16 %v936, %v932
    %v1141 = vpack.c.b16 %v937, %v933
    %v1142 = vpack.c.b16 %v938, %v934
    %v1143 = vpack.c.b16 %v943, %v939
    %v1144 = vpack.c.b16 %v944, %v940
    %v1145 = vpack.c.b16 %v945, %v941
    %v1146 = vpack.c.b16 %v946, %v942
    %v1147 = vpack.c.b16 %v951, %v947
    %v1148 = vpack.c.b16 %v952, %v948
    %v1149 = vpack.c.b16 %v953, %v949
    %v1150 = vpack.c.b16 %v954, %v950
    %v1151 = vpack.c.b16 %v959, %v955
    %v1152 = vpack.c.b16 %v960, %v956
    %v1153 = vpack.c.b16 %v961, %v957
    %v1154 = vpack.c.b16 %v962, %v958
    %v1155 = vpack.c.b16 %v967, %v963
    %v1156 = vpack.c.b16 %v968, %v964
    %v1157 = vpack.c.b16 %v969, %v965
    %v1158 = vpack.c.b16 %v970, %v966
    %v1159 = vpack.c.b16 %v975, %v971
    %v1160 = vpack.c.b16 %v976, %v972
    %v1161 = vpack.c.b16 %v977, %v973
    %v1162 = vpack.c.b16 %v978, %v974
    %v1163 = vpack.c.b16 %v983, %v979
    %v1164 = vpack.c.b16 %v984, %v980
    %v1165 = vpack.c.b16 %v985, %v981
    %v1166 = vpack.c.b16 %v986, %v982
    %v1167 = vpack.c.b16 %v991, %v987
    %v1168 = vpack.c.b16 %v992, %v988
    %v1169 = vpack.c.b16 %v993, %v989
    %v1170 = vpack.c.b16 %v994, %v990
    %v1171 = vpack.c.b16 %v999, %v995
    %v1172 = vpack.c.b16 %v1000, %v996
    %v1173 = vpack.c.b16 %v1001, %v997
    %v1174 = vpack.c.b16 %v1002, %v998
    %v1175 = vpack.c.b16 %v1007, %v1003
    %v1176 = vpack.c.b16 %v1008, %v1004
    %v1177 = vpack.c.b16 %v1009, %v1005
    %v1178 = vpack.c.b16 %v1010, %v1006
    %v1179 = vpack.c.b16 %v1015, %v1011
    %v1180 = vpack.c.b16 %v1016, %v1012
    %v1181 = vpack.c.b16 %v1017, %v1013
    %v1182 = vpack.c.b16 %v1018, %v1014
    %v1183 = vpack.c.b16 %v1023, %v1019
    %v1184 = vpack.c.b16 %v1024, %v1020
    %v1185 = vpack.c.b16 %v1025, %v1021
    %v1186 = vpack.c.b16 %v1026, %v1022
    %v1187 = vpack.c.b16 %v1031, %v1027
    %v1188 = vpack.c.b16 %v1032, %v1028
    %v1189 = vpack.c.b16 %v1033, %v1029
    %v1190 = vpack.c.b16 %v1034, %v1030
    %v1191 = vpack.c.b16 %v1039, %v1035
    %v1192 = vpack.c.b16 %v1040, %v1036
    %v1193 = vpack.c.b16 %v1041, %v1037
    %v1194 = vpack.c.b16 %v1042, %v1038
    %v1195 = vpack.c.b16 %v1047, %v1043
    %v1196 = vpack.c.b16 %v1048, %v1044
    %v1197 = vpack.c.b16 %v1049, %v1045
    %v1198 = vpack.c.b16 %v1050, %v1046
    %v1199 = vpack.c.b16 %v1055, %v1051
    %v1200 = vpack.c.b16 %v1056, %v1052
    %v1201 = vpack.c.b16 %v1057, %v1053
    %v1202 = vpack.c.b16 %v1058, %v1054
    %v1203 = vpack.c.b16 %v1063, %v1059
    %v1204 = vpack.c.b16 %v1064, %v1060
    %v1205 = vpack.c.b16 %v1065, %v1061
    %v1206 = vpack.c.b16 %v1066, %v1062
    %v1207 = vpack.c.b16 %v1071, %v1067
    %v1208 = vpack.c.b16 %v1072, %v1068
    %v1209 = vpack.c.b16 %v1073, %v1069
    %v1210 = vpack.c.b16 %v1074, %v1070
    %v1211 = vpack.c.b16 %v1079, %v1075
    %v1212 = vpack.c.b16 %v1080, %v1076
    %v1213 = vpack.c.b16 %v1081, %v1077
    %v1214 = vpack.c.b16 %v1082, %v1078
    %v1215 = vpack.c.b16 %v1087, %v1083
    %v1216 = vpack.c.b16 %v1088, %v1084
    %v1217 = vpack.c.b16 %v1089, %v1085
    %v1218 = vpack.c.b16 %v1090, %v1086
    %v1348 = vlaneseq
    %v1349 = vshrl.u32 %v1348, 7
    %v1350 = vsub.s32 0, %v1349
    %v1351 = vrot.slane %v706, %v1350
    %v1352 = vlaneseq
    %v1353 = vshrl.u32 %v1352, 7
    %v1354 = vsub.s32 1, %v1353
    %v1355 = vrot.slane %v706, %v1354
    %v1356 = vlaneseq
    %v1357 = vshrl.u32 %v1356, 7
    %v1358 = vsub.s32 2, %v1357
    %v1359 = vrot.slane %v706, %v1358
    %v1360 = vlaneseq
    %v1361 = vshrl.u32 %v1360, 7
    %v1362 = vsub.s32 3, %v1361
    %v1363 = vrot.slane %v706, %v1362
    %1368 = vmatprep.subr.bf16.mxu0 %v1120
    %1369 = vmatpush1.bf16.msra.mxu0 %v1119
    %1370 = vmatprep.subr.bf16.mxu0 %v1116
    %1371 = vmatpush1.bf16.msra.mxu0 %v1115
    %1372 = vmatprep.subr.bf16.mxu0 %v1112
    %1373 = vmatpush1.bf16.msra.mxu0 %v1111
    %1374 = vmatprep.subr.bf16.mxu0 %v1108
    %1375 = vmatpush1.bf16.msra.mxu0 %v1107
    %1376 = vmatprep.subr.bf16.mxu0 %v1104
    %1377 = vmatpush1.bf16.msra.mxu0 %v1103
    %1378 = vmatprep.subr.bf16.mxu0 %v1100
    %1379 = vmatpush1.bf16.msra.mxu0 %v1099
    %1380 = vmatprep.subr.bf16.mxu0 %v1096
    %1381 = vmatpush1.bf16.msra.mxu0 %v1095
    %1382 = vmatprep.subr.bf16.mxu0 %v1092
    %1383 = vmatpush1.bf16.msra.mxu0 %v1091
    %1384 = vmatprep.subr.bf16.mxu0 %v1152
    %1385 = vmatpush2.bf16.msra.mxu0 %v1151
    %1386 = vmatprep.subr.bf16.mxu0 %v1148
    %1387 = vmatpush2.bf16.msra.mxu0 %v1147
    %1388 = vmatprep.subr.bf16.mxu0 %v1144
    %1389 = vmatpush2.bf16.msra.mxu0 %v1143
    %1390 = vmatprep.subr.bf16.mxu0 %v1140
    %1391 = vmatpush2.bf16.msra.mxu0 %v1139
    %1392 = vmatprep.subr.bf16.mxu0 %v1136
    %1393 = vmatpush2.bf16.msra.mxu0 %v1135
    %1394 = vmatprep.subr.bf16.mxu0 %v1132
    %1395 = vmatpush2.bf16.msra.mxu0 %v1131
    %1396 = vmatprep.subr.bf16.mxu0 %v1128
    %1397 = vmatpush2.bf16.msra.mxu0 %v1127
    %1398 = vmatprep.subr.bf16.mxu0 %v1124
    %1399 = vmatpush2.bf16.msra.mxu0 %v1123
    %1400 = vmatprep.mubr.bf16.mxu0 %v575
    %1401 = vmatmul.mubr.bf16.gmra.mxu0 %v574
    %v1402 = vpop.f32.mrf.mxu0
    %v1403 = vadd.f32 %v1351, %v1402
    %v1404 = vpop.f32.mrf.mxu0
    %v1405 = vadd.f32 %v1355, %v1404
    %v1406 = vpop.f32.mrf.mxu0
    %v1407 = vpop.f32.mrf.mxu0
    %1408 = vdwg.mxu0
    %1409 = vmatprep.subr.bf16.mxu0 %v1184
    %1410 = vmatpush1.bf16.msra.mxu0 %v1183
    %1411 = vmatprep.subr.bf16.mxu0 %v1180
    %1412 = vmatpush1.bf16.msra.mxu0 %v1179
    %1413 = vmatprep.subr.bf16.mxu0 %v1176
    %1414 = vmatpush1.bf16.msra.mxu0 %v1175
    %1415 = vmatprep.subr.bf16.mxu0 %v1172
    %1416 = vmatpush1.bf16.msra.mxu0 %v1171
    %1417 = vmatprep.subr.bf16.mxu0 %v1168
    %1418 = vmatpush1.bf16.msra.mxu0 %v1167
    %1419 = vmatprep.subr.bf16.mxu0 %v1164
    %1420 = vmatpush1.bf16.msra.mxu0 %v1163
    %1421 = vmatprep.subr.bf16.mxu0 %v1160
    %1422 = vmatpush1.bf16.msra.mxu0 %v1159
    %1423 = vmatprep.subr.bf16.mxu0 %v1156
    %1424 = vmatpush1.bf16.msra.mxu0 %v1155
    %1425 = vmatprep.subr.bf16.mxu0 %v1216
    %1426 = vmatpush2.bf16.msra.mxu0 %v1215
    %1427 = vmatprep.subr.bf16.mxu0 %v1212
    %1428 = vmatpush2.bf16.msra.mxu0 %v1211
    %1429 = vmatprep.subr.bf16.mxu0 %v1208
    %1430 = vmatpush2.bf16.msra.mxu0 %v1207
    %1431 = vmatprep.subr.bf16.mxu0 %v1204
    %1432 = vmatpush2.bf16.msra.mxu0 %v1203
    %1433 = vmatprep.subr.bf16.mxu0 %v1200
    %1434 = vmatpush2.bf16.msra.mxu0 %v1199
    %1435 = vmatprep.subr.bf16.mxu0 %v1196
    %1436 = vmatpush2.bf16.msra.mxu0 %v1195
    %1437 = vmatprep.subr.bf16.mxu0 %v1192
    %1438 = vmatpush2.bf16.msra.mxu0 %v1191
    %1439 = vmatprep.subr.bf16.mxu0 %v1188
    %1440 = vmatpush2.bf16.msra.mxu0 %v1187
    %1441 = vmatprep.mubr.bf16.mxu0 %v577
    %1442 = vmatmul.mubr.bf16.gmra.mxu0 %v576
    %v1443 = vpop.f32.mrf.mxu0
    %v1444 = vadd.f32 %v1403, %v1443
    %v1445 = vpop.f32.mrf.mxu0
    %v1446 = vadd.f32 %v1405, %v1445
    %v1447 = vpop.f32.mrf.mxu0
    %v1448 = vpop.f32.mrf.mxu0
    %1449 = vdwg.mxu0
    %1450 = vmatprep.subr.bf16.mxu0 %v1122
    %1451 = vmatpush1.bf16.msra.mxu0 %v1121
    %1452 = vmatprep.subr.bf16.mxu0 %v1118
    %1453 = vmatpush1.bf16.msra.mxu0 %v1117
    %1454 = vmatprep.subr.bf16.mxu0 %v1114
    %1455 = vmatpush1.bf16.msra.mxu0 %v1113
    %1456 = vmatprep.subr.bf16.mxu0 %v1110
    %1457 = vmatpush1.bf16.msra.mxu0 %v1109
    %1458 = vmatprep.subr.bf16.mxu0 %v1106
    %1459 = vmatpush1.bf16.msra.mxu0 %v1105
    %1460 = vmatprep.subr.bf16.mxu0 %v1102
    %1461 = vmatpush1.bf16.msra.mxu0 %v1101
    %1462 = vmatprep.subr.bf16.mxu0 %v1098
    %1463 = vmatpush1.bf16.msra.mxu0 %v1097
    %1464 = vmatprep.subr.bf16.mxu0 %v1094
    %1465 = vmatpush1.bf16.msra.mxu0 %v1093
    %1466 = vmatprep.subr.bf16.mxu0 %v1154
    %1467 = vmatpush2.bf16.msra.mxu0 %v1153
    %1468 = vmatprep.subr.bf16.mxu0 %v1150
    %1469 = vmatpush2.bf16.msra.mxu0 %v1149
    %1470 = vmatprep.subr.bf16.mxu0 %v1146
    %1471 = vmatpush2.bf16.msra.mxu0 %v1145
    %1472 = vmatprep.subr.bf16.mxu0 %v1142
    %1473 = vmatpush2.bf16.msra.mxu0 %v1141
    %1474 = vmatprep.subr.bf16.mxu0 %v1138
    %1475 = vmatpush2.bf16.msra.mxu0 %v1137
    %1476 = vmatprep.subr.bf16.mxu0 %v1134
    %1477 = vmatpush2.bf16.msra.mxu0 %v1133
    %1478 = vmatprep.subr.bf16.mxu0 %v1130
    %1479 = vmatpush2.bf16.msra.mxu0 %v1129
    %1480 = vmatprep.subr.bf16.mxu0 %v1126
    %1481 = vmatpush2.bf16.msra.mxu0 %v1125
    %1482 = vmatprep.mubr.bf16.mxu0 %v575
    %1483 = vmatmul.mubr.bf16.gmra.mxu0 %v574
    %v1484 = vpop.f32.mrf.mxu0
    %v1485 = vadd.f32 %v1359, %v1484
    %v1486 = vpop.f32.mrf.mxu0
    %v1487 = vadd.f32 %v1363, %v1486
    %v1488 = vpop.f32.mrf.mxu0
    %v1489 = vpop.f32.mrf.mxu0
    %1490 = vdwg.mxu0
    %1491 = vmatprep.subr.bf16.mxu0 %v1186
    %1492 = vmatpush1.bf16.msra.mxu0 %v1185
    %1493 = vmatprep.subr.bf16.mxu0 %v1182
    %1494 = vmatpush1.bf16.msra.mxu0 %v1181
    %1495 = vmatprep.subr.bf16.mxu0 %v1178
    %1496 = vmatpush1.bf16.msra.mxu0 %v1177
    %1497 = vmatprep.subr.bf16.mxu0 %v1174
    %1498 = vmatpush1.bf16.msra.mxu0 %v1173
    %1499 = vmatprep.subr.bf16.mxu0 %v1170
    %1500 = vmatpush1.bf16.msra.mxu0 %v1169
    %1501 = vmatprep.subr.bf16.mxu0 %v1166
    %1502 = vmatpush1.bf16.msra.mxu0 %v1165
    %1503 = vmatprep.subr.bf16.mxu0 %v1162
    %1504 = vmatpush1.bf16.msra.mxu0 %v1161
    %1505 = vmatprep.subr.bf16.mxu0 %v1158
    %1506 = vmatpush1.bf16.msra.mxu0 %v1157
    %1507 = vmatprep.subr.bf16.mxu0 %v1218
    %1508 = vmatpush2.bf16.msra.mxu0 %v1217
    %1509 = vmatprep.subr.bf16.mxu0 %v1214
    %1510 = vmatpush2.bf16.msra.mxu0 %v1213
    %1511 = vmatprep.subr.bf16.mxu0 %v1210
    %1512 = vmatpush2.bf16.msra.mxu0 %v1209
    %1513 = vmatprep.subr.bf16.mxu0 %v1206
    %1514 = vmatpush2.bf16.msra.mxu0 %v1205
    %1515 = vmatprep.subr.bf16.mxu0 %v1202
    %1516 = vmatpush2.bf16.msra.mxu0 %v1201
    %1517 = vmatprep.subr.bf16.mxu0 %v1198
    %1518 = vmatpush2.bf16.msra.mxu0 %v1197
    %1519 = vmatprep.subr.bf16.mxu0 %v1194
    %1520 = vmatpush2.bf16.msra.mxu0 %v1193
    %1521 = vmatprep.subr.bf16.mxu0 %v1190
    %1522 = vmatpush2.bf16.msra.mxu0 %v1189
    %1523 = vmatprep.mubr.bf16.mxu0 %v577
    %1524 = vmatmul.mubr.bf16.gmra.mxu0 %v576
    %v1525 = vpop.f32.mrf.mxu0
    %v1526 = vadd.f32 %v1485, %v1525
    %v1527 = vpop.f32.mrf.mxu0
    %v1528 = vadd.f32 %v1487, %v1527
    %v1529 = vpop.f32.mrf.mxu0
    %v1530 = vpop.f32.mrf.mxu0
    %1531 = vdwg.mxu0
    %v1532 = vmax.f32 %v1444, 0.0
    %v1533 = vmax.f32 %v1446, 0.0
    %v1534 = vmax.f32 %v1526, 0.0
    %v1535 = vmax.f32 %v1528, 0.0
    %v1536 = vpack.c.bf16 %v1532, %v1532
    %v1537 = vpack.c.bf16 %v1533, %v1533
    %v1538 = vpack.c.bf16 %v1534, %v1534
    %v1539 = vpack.c.bf16 %v1535, %v1535
    %v1540 = vld [vmem:[#allocation6] sm:$0xf]
    %v1541 = vld [vmem:[#allocation6 + $0x4] sm:$0xf]
    %v1542 = vld [vmem:[#allocation6 + $0x8] sm:$0xf]
    %v1543 = vld [vmem:[#allocation6 + $0xc] sm:$0xf]
    %v1544 = vld [vmem:[#allocation6 + $0x10] sm:$0xf]
    %v1545 = vld [vmem:[#allocation6 + $0x14] sm:$0xf]
    %v1546 = vld [vmem:[#allocation6 + $0x18] sm:$0xf]
    %v1547 = vld [vmem:[#allocation6 + $0x1c] sm:$0xf]
    %v1548 = vld [vmem:[#allocation6 + $0x20] sm:$0xf]
    %v1549 = vld [vmem:[#allocation6 + $0x24] sm:$0xf]
    %v1550 = vld [vmem:[#allocation6 + $0x28] sm:$0xf]
    %v1551 = vld [vmem:[#allocation6 + $0x2c] sm:$0xf]
    %v1552 = vld [vmem:[#allocation6 + $0x30] sm:$0xf]
    %v1553 = vld [vmem:[#allocation6 + $0x34] sm:$0xf]
    %v1554 = vld [vmem:[#allocation6 + $0x38] sm:$0xf]
    %v1555 = vld [vmem:[#allocation6 + $0x3c] sm:$0xf]
    %v1556 = vld [vmem:[#allocation6 + $0x40] sm:$0xf]
    %v1557 = vld [vmem:[#allocation6 + $0x44] sm:$0xf]
    %v1558 = vld [vmem:[#allocation6 + $0x48] sm:$0xf]
    %v1559 = vld [vmem:[#allocation6 + $0x4c] sm:$0xf]
    %v1560 = vld [vmem:[#allocation6 + $0x50] sm:$0xf]
    %v1561 = vld [vmem:[#allocation6 + $0x54] sm:$0xf]
    %v1562 = vld [vmem:[#allocation6 + $0x58] sm:$0xf]
    %v1563 = vld [vmem:[#allocation6 + $0x5c] sm:$0xf]
    %v1564 = vld [vmem:[#allocation6 + $0x60] sm:$0xf]
    %v1565 = vld [vmem:[#allocation6 + $0x64] sm:$0xf]
    %v1566 = vld [vmem:[#allocation6 + $0x68] sm:$0xf]
    %v1567 = vld [vmem:[#allocation6 + $0x6c] sm:$0xf]
    %v1568 = vld [vmem:[#allocation6 + $0x70] sm:$0xf]
    %v1569 = vld [vmem:[#allocation6 + $0x74] sm:$0xf]
    %v1570 = vld [vmem:[#allocation6 + $0x78] sm:$0xf]
    %v1571 = vld [vmem:[#allocation6 + $0x7c] sm:$0xf]
    %v1572 = vld [vmem:[#allocation6 + $0x80] sm:$0xf]
    %v1573 = vld [vmem:[#allocation6 + $0x84] sm:$0xf]
    %v1574 = vld [vmem:[#allocation6 + $0x88] sm:$0xf]
    %v1575 = vld [vmem:[#allocation6 + $0x8c] sm:$0xf]
    %v1576 = vld [vmem:[#allocation6 + $0x90] sm:$0xf]
    %v1577 = vld [vmem:[#allocation6 + $0x94] sm:$0xf]
    %v1578 = vld [vmem:[#allocation6 + $0x98] sm:$0xf]
    %v1579 = vld [vmem:[#allocation6 + $0x9c] sm:$0xf]
    %v1580 = vld [vmem:[#allocation6 + $0xa0] sm:$0xf]
    %v1581 = vld [vmem:[#allocation6 + $0xa4] sm:$0xf]
    %v1582 = vld [vmem:[#allocation6 + $0xa8] sm:$0xf]
    %v1583 = vld [vmem:[#allocation6 + $0xac] sm:$0xf]
    %v1584 = vld [vmem:[#allocation6 + $0xb0] sm:$0xf]
    %v1585 = vld [vmem:[#allocation6 + $0xb4] sm:$0xf]
    %v1586 = vld [vmem:[#allocation6 + $0xb8] sm:$0xf]
    %v1587 = vld [vmem:[#allocation6 + $0xbc] sm:$0xf]
    %v1588 = vld [vmem:[#allocation6 + $0xc0] sm:$0xf]
    %v1589 = vld [vmem:[#allocation6 + $0xc4] sm:$0xf]
    %v1590 = vld [vmem:[#allocation6 + $0xc8] sm:$0xf]
    %v1591 = vld [vmem:[#allocation6 + $0xcc] sm:$0xf]
    %v1592 = vld [vmem:[#allocation6 + $0xd0] sm:$0xf]
    %v1593 = vld [vmem:[#allocation6 + $0xd4] sm:$0xf]
    %v1594 = vld [vmem:[#allocation6 + $0xd8] sm:$0xf]
    %v1595 = vld [vmem:[#allocation6 + $0xdc] sm:$0xf]
    %v1596 = vld [vmem:[#allocation6 + $0xe0] sm:$0xf]
    %v1597 = vld [vmem:[#allocation6 + $0xe4] sm:$0xf]
    %v1598 = vld [vmem:[#allocation6 + $0xe8] sm:$0xf]
    %v1599 = vld [vmem:[#allocation6 + $0xec] sm:$0xf]
    %v1600 = vld [vmem:[#allocation6 + $0xf0] sm:$0xf]
    %v1601 = vld [vmem:[#allocation6 + $0xf4] sm:$0xf]
    %v1602 = vld [vmem:[#allocation6 + $0xf8] sm:$0xf]
    %v1603 = vld [vmem:[#allocation6 + $0xfc] sm:$0xf]
    %v1604 = vld [vmem:[%s6] sm:$0x1]
    %v1669 = vunpack.c.l.b16 %v1540
    %v1670 = vunpack.c.l.b16 %v1541
    %v1671 = vunpack.c.l.b16 %v1542
    %v1672 = vunpack.c.l.b16 %v1543
    %v1673 = vunpack.c.l.b16 %v1544
    %v1674 = vunpack.c.l.b16 %v1545
    %v1675 = vunpack.c.l.b16 %v1546
    %v1676 = vunpack.c.l.b16 %v1547
    %v1677 = vunpack.c.l.b16 %v1548
    %v1678 = vunpack.c.l.b16 %v1549
    %v1679 = vunpack.c.l.b16 %v1550
    %v1680 = vunpack.c.l.b16 %v1551
    %v1681 = vunpack.c.l.b16 %v1552
    %v1682 = vunpack.c.l.b16 %v1553
    %v1683 = vunpack.c.l.b16 %v1554
    %v1684 = vunpack.c.l.b16 %v1555
    %v1685 = vunpack.c.l.b16 %v1556
    %v1686 = vunpack.c.l.b16 %v1557
    %v1687 = vunpack.c.l.b16 %v1558
    %v1688 = vunpack.c.l.b16 %v1559
    %v1689 = vunpack.c.l.b16 %v1560
    %v1690 = vunpack.c.l.b16 %v1561
    %v1691 = vunpack.c.l.b16 %v1562
    %v1692 = vunpack.c.l.b16 %v1563
    %v1693 = vunpack.c.l.b16 %v1564
    %v1694 = vunpack.c.l.b16 %v1565
    %v1695 = vunpack.c.l.b16 %v1566
    %v1696 = vunpack.c.l.b16 %v1567
    %v1697 = vunpack.c.l.b16 %v1568
    %v1698 = vunpack.c.l.b16 %v1569
    %v1699 = vunpack.c.l.b16 %v1570
    %v1700 = vunpack.c.l.b16 %v1571
    %v1701 = vunpack.c.l.b16 %v1572
    %v1702 = vunpack.c.l.b16 %v1573
    %v1703 = vunpack.c.l.b16 %v1574
    %v1704 = vunpack.c.l.b16 %v1575
    %v1705 = vunpack.c.l.b16 %v1576
    %v1706 = vunpack.c.l.b16 %v1577
    %v1707 = vunpack.c.l.b16 %v1578
    %v1708 = vunpack.c.l.b16 %v1579
    %v1709 = vunpack.c.l.b16 %v1580
    %v1710 = vunpack.c.l.b16 %v1581
    %v1711 = vunpack.c.l.b16 %v1582
    %v1712 = vunpack.c.l.b16 %v1583
    %v1713 = vunpack.c.l.b16 %v1584
    %v1714 = vunpack.c.l.b16 %v1585
    %v1715 = vunpack.c.l.b16 %v1586
    %v1716 = vunpack.c.l.b16 %v1587
    %v1717 = vunpack.c.l.b16 %v1588
    %v1718 = vunpack.c.l.b16 %v1589
    %v1719 = vunpack.c.l.b16 %v1590
    %v1720 = vunpack.c.l.b16 %v1591
    %v1721 = vunpack.c.l.b16 %v1592
    %v1722 = vunpack.c.l.b16 %v1593
    %v1723 = vunpack.c.l.b16 %v1594
    %v1724 = vunpack.c.l.b16 %v1595
    %v1725 = vunpack.c.l.b16 %v1596
    %v1726 = vunpack.c.l.b16 %v1597
    %v1727 = vunpack.c.l.b16 %v1598
    %v1728 = vunpack.c.l.b16 %v1599
    %v1729 = vunpack.c.l.b16 %v1600
    %v1730 = vunpack.c.l.b16 %v1601
    %v1731 = vunpack.c.l.b16 %v1602
    %v1732 = vunpack.c.l.b16 %v1603
    %v1733 = vpack.c.b16 %v1670, %v1669
    %v1734 = vpack.c.b16 %v1672, %v1671
    %v1735 = vpack.c.b16 %v1674, %v1673
    %v1736 = vpack.c.b16 %v1676, %v1675
    %v1737 = vpack.c.b16 %v1678, %v1677
    %v1738 = vpack.c.b16 %v1680, %v1679
    %v1739 = vpack.c.b16 %v1682, %v1681
    %v1740 = vpack.c.b16 %v1684, %v1683
    %v1741 = vpack.c.b16 %v1686, %v1685
    %v1742 = vpack.c.b16 %v1688, %v1687
    %v1743 = vpack.c.b16 %v1690, %v1689
    %v1744 = vpack.c.b16 %v1692, %v1691
    %v1745 = vpack.c.b16 %v1694, %v1693
    %v1746 = vpack.c.b16 %v1696, %v1695
    %v1747 = vpack.c.b16 %v1698, %v1697
    %v1748 = vpack.c.b16 %v1700, %v1699
    %v1749 = vpack.c.b16 %v1702, %v1701
    %v1750 = vpack.c.b16 %v1704, %v1703
    %v1751 = vpack.c.b16 %v1706, %v1705
    %v1752 = vpack.c.b16 %v1708, %v1707
    %v1753 = vpack.c.b16 %v1710, %v1709
    %v1754 = vpack.c.b16 %v1712, %v1711
    %v1755 = vpack.c.b16 %v1714, %v1713
    %v1756 = vpack.c.b16 %v1716, %v1715
    %v1757 = vpack.c.b16 %v1718, %v1717
    %v1758 = vpack.c.b16 %v1720, %v1719
    %v1759 = vpack.c.b16 %v1722, %v1721
    %v1760 = vpack.c.b16 %v1724, %v1723
    %v1761 = vpack.c.b16 %v1726, %v1725
    %v1762 = vpack.c.b16 %v1728, %v1727
    %v1763 = vpack.c.b16 %v1730, %v1729
    %v1764 = vpack.c.b16 %v1732, %v1731
    %1797 = vmatprep.subr.bf16.mxu0 0
    %1798 = vmatpush1.bf16.msra.mxu0 %v1740
    %1799 = vmatprep.subr.bf16.mxu0 0
    %1800 = vmatpush1.bf16.msra.mxu0 %v1739
    %1801 = vmatprep.subr.bf16.mxu0 0
    %1802 = vmatpush1.bf16.msra.mxu0 %v1738
    %1803 = vmatprep.subr.bf16.mxu0 0
    %1804 = vmatpush1.bf16.msra.mxu0 %v1737
    %1805 = vmatprep.subr.bf16.mxu0 0
    %1806 = vmatpush1.bf16.msra.mxu0 %v1736
    %1807 = vmatprep.subr.bf16.mxu0 0
    %1808 = vmatpush1.bf16.msra.mxu0 %v1735
    %1809 = vmatprep.subr.bf16.mxu0 0
    %1810 = vmatpush1.bf16.msra.mxu0 %v1734
    %1811 = vmatprep.subr.bf16.mxu0 0
    %1812 = vmatpush1.bf16.msra.mxu0 %v1733
    %1813 = vmatprep.subr.bf16.mxu0 0
    %1814 = vmatpush2.bf16.msra.mxu0 %v1748
    %1815 = vmatprep.subr.bf16.mxu0 0
    %1816 = vmatpush2.bf16.msra.mxu0 %v1747
    %1817 = vmatprep.subr.bf16.mxu0 0
    %1818 = vmatpush2.bf16.msra.mxu0 %v1746
    %1819 = vmatprep.subr.bf16.mxu0 0
    %1820 = vmatpush2.bf16.msra.mxu0 %v1745
    %1821 = vmatprep.subr.bf16.mxu0 0
    %1822 = vmatpush2.bf16.msra.mxu0 %v1744
    %1823 = vmatprep.subr.bf16.mxu0 0
    %1824 = vmatpush2.bf16.msra.mxu0 %v1743
    %1825 = vmatprep.subr.bf16.mxu0 0
    %1826 = vmatpush2.bf16.msra.mxu0 %v1742
    %1827 = vmatprep.subr.bf16.mxu0 0
    %1828 = vmatpush2.bf16.msra.mxu0 %v1741
    %1829 = vmatprep.mubr.bf16.mxu0 %v1537
    %1830 = vmatmul.mubr.bf16.gmra.mxu0 %v1536
    %v1831 = vpop.f32.mrf.mxu0
    %v1832 = vadd.f32 %v1604, %v1831
    %v1833 = vpop.f32.mrf.mxu0
    %v1834 = vpop.f32.mrf.mxu0
    %v1835 = vpop.f32.mrf.mxu0
    %1836 = vdwg.mxu0
    %1837 = vmatprep.subr.bf16.mxu0 0
    %1838 = vmatpush1.bf16.msra.mxu0 %v1756
    %1839 = vmatprep.subr.bf16.mxu0 0
    %1840 = vmatpush1.bf16.msra.mxu0 %v1755
    %1841 = vmatprep.subr.bf16.mxu0 0
    %1842 = vmatpush1.bf16.msra.mxu0 %v1754
    %1843 = vmatprep.subr.bf16.mxu0 0
    %1844 = vmatpush1.bf16.msra.mxu0 %v1753
    %1845 = vmatprep.subr.bf16.mxu0 0
    %1846 = vmatpush1.bf16.msra.mxu0 %v1752
    %1847 = vmatprep.subr.bf16.mxu0 0
    %1848 = vmatpush1.bf16.msra.mxu0 %v1751
    %1849 = vmatprep.subr.bf16.mxu0 0
    %1850 = vmatpush1.bf16.msra.mxu0 %v1750
    %1851 = vmatprep.subr.bf16.mxu0 0
    %1852 = vmatpush1.bf16.msra.mxu0 %v1749
    %1853 = vmatprep.subr.bf16.mxu0 0
    %1854 = vmatpush2.bf16.msra.mxu0 %v1764
    %1855 = vmatprep.subr.bf16.mxu0 0
    %1856 = vmatpush2.bf16.msra.mxu0 %v1763
    %1857 = vmatprep.subr.bf16.mxu0 0
    %1858 = vmatpush2.bf16.msra.mxu0 %v1762
    %1859 = vmatprep.subr.bf16.mxu0 0
    %1860 = vmatpush2.bf16.msra.mxu0 %v1761
    %1861 = vmatprep.subr.bf16.mxu0 0
    %1862 = vmatpush2.bf16.msra.mxu0 %v1760
    %1863 = vmatprep.subr.bf16.mxu0 0
    %1864 = vmatpush2.bf16.msra.mxu0 %v1759
    %1865 = vmatprep.subr.bf16.mxu0 0
    %1866 = vmatpush2.bf16.msra.mxu0 %v1758
    %1867 = vmatprep.subr.bf16.mxu0 0
    %1868 = vmatpush2.bf16.msra.mxu0 %v1757
    %1869 = vmatprep.mubr.bf16.mxu0 %v1539
    %1870 = vmatmul.mubr.bf16.gmra.mxu0 %v1538
    %v1871 = vpop.f32.mrf.mxu0
    %v1872 = vadd.f32 %v1832, %v1871
    %v1873 = vpop.f32.mrf.mxu0
    %v1874 = vpop.f32.mrf.mxu0
    %v1875 = vpop.f32.mrf.mxu0
    %1876 = vdwg.mxu0
    %1877 = vst [vmem:[%s7] sm:$0x1] %v1872
    // Predicated region
    $region42: #{_mlp_forward_impl.1} parent=1 // pred_check
      _
    $region43: #{_mlp_forward_impl.1} parent=1 // pred_check_branch
      %1879 = sbr.rel (0) target = $region45
    $region44: #{_mlp_forward_impl.1} parent=1 // pred_region
      _
    $region45: #{_mlp_forward_impl.1} parent=1 // pred_fallthru
      _
    // Predicated region
    $region46: #{_mlp_forward_impl.1} parent=1 // pred_check
      _
    $region47: #{_mlp_forward_impl.1} parent=1 // pred_check_branch
      %1881 = sbr.rel (0) target = $region49
    $region48: #{_mlp_forward_impl.1} parent=1 // pred_region
      _
    $region49: #{_mlp_forward_impl.1} parent=1 // pred_fallthru
      _
    %1882 = vsyncpa [#allocation3], 1
    %1883 = vsyncpa [#allocation5], 1

</llo_original>
